<compile_context>
chip_gen: v7x
topology: tpu7x:2x2x1
jax: 0.10.0
libtpu: 0.0.40
codegen_flags: <defaults>
</compile_context>

<pallas_src>
import math

import jax
import jax.numpy as jnp
from jax import lax
from jax.experimental import pallas as pl
from jax.experimental.pallas import tpu as pltpu


def _mish(x):
    # x * tanh(softplus(x)); stable softplus written with exp/log only (Mosaic-safe).
    sp = jnp.maximum(x, 0.0) + jnp.log(1.0 + jnp.exp(-jnp.abs(x)))
    return x * jnp.tanh(sp)


def _densify_grouped_weight(w_dw, c_in, c_out, groups):
    """(Cout, Cin//groups, K, K) grouped weight -> dense (Cout, Cin, K, K) with zeros."""
    cpg_in = c_in // groups
    cpg_out = c_out // groups
    o_idx = jnp.arange(c_out)
    i_idx = jnp.arange(c_in)
    group_of_o = o_idx // cpg_out                                   # (Cout,)
    mask = (i_idx[None, :] // cpg_in) == group_of_o[:, None]        # (Cout, Cin)
    j = jnp.clip(i_idx[None, :] - (group_of_o * cpg_in)[:, None], 0, cpg_in - 1)
    w_dense = jnp.take_along_axis(w_dw, j[:, :, None, None], axis=1)  # (Cout, Cin, K, K)
    return w_dense * mask[:, :, None, None].astype(w_dw.dtype)


def sep_conv_bn(x, w_dw, w_pw, bn1, bn2, *, kernel_size=3, rate=1, stride=1,
                depth_activation=False, eps=1e-3):
    """Fused SepConvBN forward.

    x:    (N, Cin, H, W)
    w_dw: (Cout, Cin//groups, K, K)   grouped/"depthwise" conv weight
    w_pw: (Cout, Cout)                1x1 pointwise conv weight
    bn1, bn2: tuples (gamma, beta, running_mean, running_var), each (Cout,)
    """
    if stride != 1:
        # TODO(synk): stride != 1 ('valid' padding + explicit ZeroPad2d) path not implemented.
        raise NotImplementedError("sep_conv_bn: only the stride=1 / 'same' path is implemented")

    n, c_in, h, w = x.shape
    c_out = w_dw.shape[0]
    kk = kernel_size
    groups = math.gcd(c_in, c_out)

    # 'same' padding for stride=1 dilated conv.
    pad_total = rate * (kk - 1)
    pad_beg = pad_total // 2
    pad_end = pad_total - pad_beg
    hp = h + pad_total
    wp = w + pad_total
    l_out = h * wp                           # conv output computed on padded-width grid
    l_in = hp * wp + (kk - 1) * rate         # extra tail so the largest tap slice fits

    # ---- host/XLA-side parameter prep (glue) ----
    w_dense = _densify_grouped_weight(w_dw.astype(jnp.float32), c_in, c_out, groups)
    w_taps = jnp.transpose(w_dense, (2, 3, 0, 1)).reshape(kk * kk, c_out, c_in)  # (K*K,Cout,Cin)
    w_pw_f = w_pw.astype(jnp.float32)

    def _fold_bn(bn):
        g, b, m, v = (p.astype(jnp.float32) for p in bn)
        s = g / jnp.sqrt(v + eps)
        return s.reshape(c_out, 1), (b - m * s).reshape(c_out, 1)

    s1, b1 = _fold_bn(bn1)
    s2, b2 = _fold_bn(bn2)

    # Pad spatially (zeros), flatten spatial, pad flat tail. mish(0) == 0, so applying
    # Mish inside the kernel to the padded slab matches PyTorch (Mish before conv pad).
    xp = jnp.pad(x, ((0, 0), (0, 0), (pad_beg, pad_end), (pad_beg, pad_end)))
    xf = xp.reshape(n, c_in, hp * wp)
    xf = jnp.pad(xf, ((0, 0), (0, 0), (0, l_in - hp * wp)))

    # ---- fused Pallas kernel ----
    def kernel(x_ref, wdw_ref, wpw_ref, s1_ref, b1_ref, s2_ref, b2_ref, o_ref):
        xv = x_ref[0]                                     # (Cin, L_in), native dtype
        if not depth_activation:
            xv = _mish(xv.astype(jnp.float32))
        else:
            xv = xv.astype(jnp.float32)

        acc = jnp.zeros((c_out, l_out), jnp.float32)
        t = 0
        for ky in range(kk):
            for kx in range(kk):
                off = ky * rate * wp + kx * rate
                win = xv[:, off:off + l_out]              # (Cin, L_out), lane slice only
                acc = acc + jnp.dot(wdw_ref[t], win,
                                    preferred_element_type=jnp.float32)
                t += 1

        y = acc * s1_ref[...] + b1_ref[...]               # BN1 (per-channel scale/shift)
        if depth_activation:
            y = _mish(y)

        z = jnp.dot(wpw_ref[...], y, preferred_element_type=jnp.float32)  # 1x1 pointwise
        z = z * s2_ref[...] + b2_ref[...]                 # BN2
        if depth_activation:
            z = _mish(z)

        o_ref[0] = z.astype(o_ref.dtype)                  # lane-dense (L_out lanes) store

    if depth_activation:
        n_transc = 3 * n * 2 * c_out * l_out
    else:
        n_transc = 3 * n * c_in * l_in

    out_flat = pl.pallas_call(
        kernel,
        out_shape=jax.ShapeDtypeStruct((n, c_out, l_out), x.dtype),
        grid_spec=pltpu.PrefetchScalarGridSpec(
            num_scalar_prefetch=0,
            grid=(n,),
            in_specs=[
                pl.BlockSpec((1, c_in, l_in), lambda i: (i, 0, 0)),
                pl.BlockSpec((kk * kk, c_out, c_in), lambda i: (0, 0, 0)),
                pl.BlockSpec((c_out, c_out), lambda i: (0, 0)),
                pl.BlockSpec((c_out, 1), lambda i: (0, 0)),
                pl.BlockSpec((c_out, 1), lambda i: (0, 0)),
                pl.BlockSpec((c_out, 1), lambda i: (0, 0)),
                pl.BlockSpec((c_out, 1), lambda i: (0, 0)),
            ],
            out_specs=pl.BlockSpec((1, c_out, l_out), lambda i: (i, 0, 0)),
        ),
        compiler_params=pltpu.CompilerParams(
            dimension_semantics=("parallel",),
        ),
        cost_estimate=pl.CostEstimate(
            flops=2 * n * c_out * l_out * (kk * kk * c_in + c_out),
            transcendentals=n_transc,
            bytes_accessed=4 * (n * c_in * l_in + n * c_out * l_out
                                + kk * kk * c_out * c_in + c_out * c_out + 4 * c_out),
        ),
    )(xf, w_taps, w_pw_f, s1, b1, s2, b2)

    # Crop the padded-width columns back to W and restore NCHW.
    return out_flat.reshape(n, c_out, h, wp)[:, :, :, :w]


# ---------------- pure-JAX reference (mirrors the PyTorch module, eval mode) ----------------
def sep_conv_bn_ref(x, w_dw, w_pw, bn1, bn2, *, kernel_size=3, rate=1,
                    depth_activation=False, eps=1e-3):
    n, c_in, h, w = x.shape
    c_out = w_dw.shape[0]
    groups = math.gcd(c_in, c_out)
    pad_total = rate * (kernel_size - 1)
    pad_beg = pad_total // 2
    pad_end = pad_total - pad_beg

    def bn(t, params):
        g, b, m, v = params
        inv = g / jnp.sqrt(v + eps)
        return (t - m[None, :, None, None]) * inv[None, :, None, None] + b[None, :, None, None]

    if not depth_activation:
        x = _mish(x)
    y = lax.conv_general_dilated(
        x, w_dw, window_strides=(1, 1),
        padding=((pad_beg, pad_end), (pad_beg, pad_end)),
        rhs_dilation=(rate, rate),
        dimension_numbers=("NCHW", "OIHW", "NCHW"),
        feature_group_count=groups)
    y = bn(y, bn1)
    if depth_activation:
        y = _mish(y)
    z = jnp.einsum("oi,nihw->nohw", w_pw, y)
    z = bn(z, bn2)
    if depth_activation:
        z = _mish(z)
    return z


if __name__ == "__main__":
    key = jax.random.PRNGKey(0)
    N, C_IN, C_OUT, H, W = 2, 4, 8, 16, 16
    K, RATE, STRIDE = 3, 1, 1
    DEPTH_ACT = False
    EPS = 1e-3
    groups = math.gcd(C_IN, C_OUT)

    ks = jax.random.split(key, 12)
    x = jax.random.normal(ks[0], (N, C_IN, H, W), dtype=jnp.float32)
    w_dw = 0.1 * jax.random.normal(ks[1], (C_OUT, C_IN // groups, K, K), dtype=jnp.float32)
    w_pw = 0.1 * jax.random.normal(ks[2], (C_OUT, C_OUT), dtype=jnp.float32)
    gamma1 = 1.0 + 0.1 * jax.random.normal(ks[3], (C_OUT,), dtype=jnp.float32)
    beta1 = 0.1 * jax.random.normal(ks[4], (C_OUT,), dtype=jnp.float32)
    mean1 = 0.1 * jax.random.normal(ks[5], (C_OUT,), dtype=jnp.float32)
    var1 = jax.random.uniform(ks[6], (C_OUT,), jnp.float32, minval=0.5, maxval=1.5)
    gamma2 = 1.0 + 0.1 * jax.random.normal(ks[7], (C_OUT,), dtype=jnp.float32)
    beta2 = 0.1 * jax.random.normal(ks[8], (C_OUT,), dtype=jnp.float32)
    mean2 = 0.1 * jax.random.normal(ks[9], (C_OUT,), dtype=jnp.float32)
    var2 = jax.random.uniform(ks[10], (C_OUT,), jnp.float32, minval=0.5, maxval=1.5)

    bn1 = (gamma1, beta1, mean1, var1)
    bn2 = (gamma2, beta2, mean2, var2)

    out = sep_conv_bn(x, w_dw, w_pw, bn1, bn2, kernel_size=K, rate=RATE, stride=STRIDE,
                      depth_activation=DEPTH_ACT, eps=EPS)
    out = jax.block_until_ready(out)

    ref = sep_conv_bn_ref(x, w_dw, w_pw, bn1, bn2, kernel_size=K, rate=RATE,
                          depth_activation=DEPTH_ACT, eps=EPS)

    assert out.shape == (N, C_OUT, H, W)
    assert jnp.allclose(out, ref, atol=1e-4, rtol=1e-4), float(jnp.max(jnp.abs(out - ref)))

    print("KERNEL_OK")
</pallas_src>

<mosaic_0001>
module attributes {stable_mosaic.version = 11 : i64} {
  func.func @kernel(%arg0: i32, %arg1: memref<1x4x326xf32, #tpu.memory_space<vmem>>, %arg2: memref<9x8x4xf32, #tpu.memory_space<vmem>>, %arg3: memref<8x8xf32, #tpu.memory_space<vmem>>, %arg4: memref<8x1xf32, #tpu.memory_space<vmem>>, %arg5: memref<8x1xf32, #tpu.memory_space<vmem>>, %arg6: memref<8x1xf32, #tpu.memory_space<vmem>>, %arg7: memref<8x1xf32, #tpu.memory_space<vmem>>, %arg8: memref<1x8x288xf32, #tpu.memory_space<vmem>>) attributes {dimension_semantics = [#tpu.dimension_semantics<parallel>], iteration_bounds = array<i64: 2>, scalar_prefetch = 0 : i64, scratch_operands = 0 : i64, tpu.core_type = #tpu.core_type<tc>, window_params = [{transform_indices = @transform_0, window_bounds = array<i64: 1, 4, 326>}, {pipeline_mode = #tpu.pipeline_mode<synchronous>, transform_indices = @transform_1, window_bounds = array<i64: 9, 8, 4>}, {pipeline_mode = #tpu.pipeline_mode<synchronous>, transform_indices = @transform_2, window_bounds = array<i64: 8, 8>}, {pipeline_mode = #tpu.pipeline_mode<synchronous>, transform_indices = @transform_3, window_bounds = array<i64: 8, 1>}, {pipeline_mode = #tpu.pipeline_mode<synchronous>, transform_indices = @transform_4, window_bounds = array<i64: 8, 1>}, {pipeline_mode = #tpu.pipeline_mode<synchronous>, transform_indices = @transform_5, window_bounds = array<i64: 8, 1>}, {pipeline_mode = #tpu.pipeline_mode<synchronous>, transform_indices = @transform_6, window_bounds = array<i64: 8, 1>}, {transform_indices = @transform_7, window_bounds = array<i64: 1, 8, 288>}]} {
    %c0 = arith.constant 0 : index
    %c0_0 = arith.constant 0 : index
    %c0_1 = arith.constant 0 : index
    %0 = vector.load %arg1[%c0, %c0_0, %c0_1] : memref<1x4x326xf32, #tpu.memory_space<vmem>>, vector<1x4x326xf32>
    %1 = vector.shape_cast %0 : vector<1x4x326xf32> to vector<4x326xf32>
    %cst = arith.constant 0.000000e+00 : f32
    %2 = vector.broadcast %cst : f32 to vector<4x326xf32>
    %3 = arith.maximumf %1, %2 : vector<4x326xf32>
    %4 = math.absf %1 : vector<4x326xf32>
    %cst_2 = arith.constant 0.000000e+00 : f32
    %5 = vector.broadcast %cst_2 : f32 to vector<4x326xf32>
    %6 = arith.subf %5, %4 : vector<4x326xf32>
    %7 = math.exp %6 : vector<4x326xf32>
    %cst_3 = arith.constant 1.000000e+00 : f32
    %8 = vector.broadcast %cst_3 : f32 to vector<4x326xf32>
    %9 = arith.addf %8, %7 : vector<4x326xf32>
    %10 = math.log %9 : vector<4x326xf32>
    %11 = arith.addf %3, %10 : vector<4x326xf32>
    %12 = math.tanh %11 : vector<4x326xf32>
    %13 = arith.mulf %1, %12 : vector<4x326xf32>
    %cst_4 = arith.constant 0.000000e+00 : f32
    %14 = vector.broadcast %cst_4 : f32 to vector<8x288xf32>
    %15 = vector.extract_strided_slice %13 {offsets = [0, 0], sizes = [4, 288], strides = [1, 1]} : vector<4x326xf32> to vector<4x288xf32>
    %c0_5 = arith.constant 0 : index
    %c0_6 = arith.constant 0 : index
    %c0_7 = arith.constant 0 : index
    %16 = vector.load %arg2[%c0_5, %c0_6, %c0_7] : memref<9x8x4xf32, #tpu.memory_space<vmem>>, vector<1x8x4xf32>
    %17 = vector.shape_cast %16 : vector<1x8x4xf32> to vector<8x4xf32>
    %cst_8 = arith.constant dense<0.000000e+00> : vector<8x288xf32>
    %18 = tpu.matmul %17, %15, %cst_8 {dimension_numbers = #tpu.dot_dimension_numbers<[1], [0], [0], [1], [0, 0, 1, 1], [], []>} : vector<8x4xf32>, vector<4x288xf32>, vector<8x288xf32> -> vector<8x288xf32>
    %19 = arith.addf %14, %18 : vector<8x288xf32>
    %20 = vector.extract_strided_slice %13 {offsets = [0, 1], sizes = [4, 288], strides = [1, 1]} : vector<4x326xf32> to vector<4x288xf32>
    %c1 = arith.constant 1 : index
    %c0_9 = arith.constant 0 : index
    %c0_10 = arith.constant 0 : index
    %21 = vector.load %arg2[%c1, %c0_9, %c0_10] : memref<9x8x4xf32, #tpu.memory_space<vmem>>, vector<1x8x4xf32>
    %22 = vector.shape_cast %21 : vector<1x8x4xf32> to vector<8x4xf32>
    %cst_11 = arith.constant dense<0.000000e+00> : vector<8x288xf32>
    %23 = tpu.matmul %22, %20, %cst_11 {dimension_numbers = #tpu.dot_dimension_numbers<[1], [0], [0], [1], [0, 0, 1, 1], [], []>} : vector<8x4xf32>, vector<4x288xf32>, vector<8x288xf32> -> vector<8x288xf32>
    %24 = arith.addf %19, %23 : vector<8x288xf32>
    %25 = vector.extract_strided_slice %13 {offsets = [0, 2], sizes = [4, 288], strides = [1, 1]} : vector<4x326xf32> to vector<4x288xf32>
    %c2 = arith.constant 2 : index
    %c0_12 = arith.constant 0 : index
    %c0_13 = arith.constant 0 : index
    %26 = vector.load %arg2[%c2, %c0_12, %c0_13] : memref<9x8x4xf32, #tpu.memory_space<vmem>>, vector<1x8x4xf32>
    %27 = vector.shape_cast %26 : vector<1x8x4xf32> to vector<8x4xf32>
    %cst_14 = arith.constant dense<0.000000e+00> : vector<8x288xf32>
    %28 = tpu.matmul %27, %25, %cst_14 {dimension_numbers = #tpu.dot_dimension_numbers<[1], [0], [0], [1], [0, 0, 1, 1], [], []>} : vector<8x4xf32>, vector<4x288xf32>, vector<8x288xf32> -> vector<8x288xf32>
    %29 = arith.addf %24, %28 : vector<8x288xf32>
    %30 = vector.extract_strided_slice %13 {offsets = [0, 18], sizes = [4, 288], strides = [1, 1]} : vector<4x326xf32> to vector<4x288xf32>
    %c3 = arith.constant 3 : index
    %c0_15 = arith.constant 0 : index
    %c0_16 = arith.constant 0 : index
    %31 = vector.load %arg2[%c3, %c0_15, %c0_16] : memref<9x8x4xf32, #tpu.memory_space<vmem>>, vector<1x8x4xf32>
    %32 = vector.shape_cast %31 : vector<1x8x4xf32> to vector<8x4xf32>
    %cst_17 = arith.constant dense<0.000000e+00> : vector<8x288xf32>
    %33 = tpu.matmul %32, %30, %cst_17 {dimension_numbers = #tpu.dot_dimension_numbers<[1], [0], [0], [1], [0, 0, 1, 1], [], []>} : vector<8x4xf32>, vector<4x288xf32>, vector<8x288xf32> -> vector<8x288xf32>
    %34 = arith.addf %29, %33 : vector<8x288xf32>
    %35 = vector.extract_strided_slice %13 {offsets = [0, 19], sizes = [4, 288], strides = [1, 1]} : vector<4x326xf32> to vector<4x288xf32>
    %c4 = arith.constant 4 : index
    %c0_18 = arith.constant 0 : index
    %c0_19 = arith.constant 0 : index
    %36 = vector.load %arg2[%c4, %c0_18, %c0_19] : memref<9x8x4xf32, #tpu.memory_space<vmem>>, vector<1x8x4xf32>
    %37 = vector.shape_cast %36 : vector<1x8x4xf32> to vector<8x4xf32>
    %cst_20 = arith.constant dense<0.000000e+00> : vector<8x288xf32>
    %38 = tpu.matmul %37, %35, %cst_20 {dimension_numbers = #tpu.dot_dimension_numbers<[1], [0], [0], [1], [0, 0, 1, 1], [], []>} : vector<8x4xf32>, vector<4x288xf32>, vector<8x288xf32> -> vector<8x288xf32>
    %39 = arith.addf %34, %38 : vector<8x288xf32>
    %40 = vector.extract_strided_slice %13 {offsets = [0, 20], sizes = [4, 288], strides = [1, 1]} : vector<4x326xf32> to vector<4x288xf32>
    %c5 = arith.constant 5 : index
    %c0_21 = arith.constant 0 : index
    %c0_22 = arith.constant 0 : index
    %41 = vector.load %arg2[%c5, %c0_21, %c0_22] : memref<9x8x4xf32, #tpu.memory_space<vmem>>, vector<1x8x4xf32>
    %42 = vector.shape_cast %41 : vector<1x8x4xf32> to vector<8x4xf32>
    %cst_23 = arith.constant dense<0.000000e+00> : vector<8x288xf32>
    %43 = tpu.matmul %42, %40, %cst_23 {dimension_numbers = #tpu.dot_dimension_numbers<[1], [0], [0], [1], [0, 0, 1, 1], [], []>} : vector<8x4xf32>, vector<4x288xf32>, vector<8x288xf32> -> vector<8x288xf32>
    %44 = arith.addf %39, %43 : vector<8x288xf32>
    %45 = vector.extract_strided_slice %13 {offsets = [0, 36], sizes = [4, 288], strides = [1, 1]} : vector<4x326xf32> to vector<4x288xf32>
    %c6 = arith.constant 6 : index
    %c0_24 = arith.constant 0 : index
    %c0_25 = arith.constant 0 : index
    %46 = vector.load %arg2[%c6, %c0_24, %c0_25] : memref<9x8x4xf32, #tpu.memory_space<vmem>>, vector<1x8x4xf32>
    %47 = vector.shape_cast %46 : vector<1x8x4xf32> to vector<8x4xf32>
    %cst_26 = arith.constant dense<0.000000e+00> : vector<8x288xf32>
    %48 = tpu.matmul %47, %45, %cst_26 {dimension_numbers = #tpu.dot_dimension_numbers<[1], [0], [0], [1], [0, 0, 1, 1], [], []>} : vector<8x4xf32>, vector<4x288xf32>, vector<8x288xf32> -> vector<8x288xf32>
    %49 = arith.addf %44, %48 : vector<8x288xf32>
    %50 = vector.extract_strided_slice %13 {offsets = [0, 37], sizes = [4, 288], strides = [1, 1]} : vector<4x326xf32> to vector<4x288xf32>
    %c7 = arith.constant 7 : index
    %c0_27 = arith.constant 0 : index
    %c0_28 = arith.constant 0 : index
    %51 = vector.load %arg2[%c7, %c0_27, %c0_28] : memref<9x8x4xf32, #tpu.memory_space<vmem>>, vector<1x8x4xf32>
    %52 = vector.shape_cast %51 : vector<1x8x4xf32> to vector<8x4xf32>
    %cst_29 = arith.constant dense<0.000000e+00> : vector<8x288xf32>
    %53 = tpu.matmul %52, %50, %cst_29 {dimension_numbers = #tpu.dot_dimension_numbers<[1], [0], [0], [1], [0, 0, 1, 1], [], []>} : vector<8x4xf32>, vector<4x288xf32>, vector<8x288xf32> -> vector<8x288xf32>
    %54 = arith.addf %49, %53 : vector<8x288xf32>
    %55 = vector.extract_strided_slice %13 {offsets = [0, 38], sizes = [4, 288], strides = [1, 1]} : vector<4x326xf32> to vector<4x288xf32>
    %c8 = arith.constant 8 : index
    %c0_30 = arith.constant 0 : index
    %c0_31 = arith.constant 0 : index
    %56 = vector.load %arg2[%c8, %c0_30, %c0_31] : memref<9x8x4xf32, #tpu.memory_space<vmem>>, vector<1x8x4xf32>
    %57 = vector.shape_cast %56 : vector<1x8x4xf32> to vector<8x4xf32>
    %cst_32 = arith.constant dense<0.000000e+00> : vector<8x288xf32>
    %58 = tpu.matmul %57, %55, %cst_32 {dimension_numbers = #tpu.dot_dimension_numbers<[1], [0], [0], [1], [0, 0, 1, 1], [], []>} : vector<8x4xf32>, vector<4x288xf32>, vector<8x288xf32> -> vector<8x288xf32>
    %59 = arith.addf %54, %58 : vector<8x288xf32>
    %c0_33 = arith.constant 0 : index
    %c0_34 = arith.constant 0 : index
    %60 = vector.load %arg4[%c0_33, %c0_34] : memref<8x1xf32, #tpu.memory_space<vmem>>, vector<8x1xf32>
    %61 = vector.broadcast %60 : vector<8x1xf32> to vector<8x288xf32>
    %62 = arith.mulf %59, %61 : vector<8x288xf32>
    %c0_35 = arith.constant 0 : index
    %c0_36 = arith.constant 0 : index
    %63 = vector.load %arg5[%c0_35, %c0_36] : memref<8x1xf32, #tpu.memory_space<vmem>>, vector<8x1xf32>
    %64 = vector.broadcast %63 : vector<8x1xf32> to vector<8x288xf32>
    %65 = arith.addf %62, %64 : vector<8x288xf32>
    %c0_37 = arith.constant 0 : index
    %c0_38 = arith.constant 0 : index
    %66 = vector.load %arg3[%c0_37, %c0_38] : memref<8x8xf32, #tpu.memory_space<vmem>>, vector<8x8xf32>
    %cst_39 = arith.constant dense<0.000000e+00> : vector<8x288xf32>
    %67 = tpu.matmul %66, %65, %cst_39 {dimension_numbers = #tpu.dot_dimension_numbers<[1], [0], [0], [1], [0, 0, 1, 1], [], []>} : vector<8x8xf32>, vector<8x288xf32>, vector<8x288xf32> -> vector<8x288xf32>
    %c0_40 = arith.constant 0 : index
    %c0_41 = arith.constant 0 : index
    %68 = vector.load %arg6[%c0_40, %c0_41] : memref<8x1xf32, #tpu.memory_space<vmem>>, vector<8x1xf32>
    %69 = vector.broadcast %68 : vector<8x1xf32> to vector<8x288xf32>
    %70 = arith.mulf %67, %69 : vector<8x288xf32>
    %c0_42 = arith.constant 0 : index
    %c0_43 = arith.constant 0 : index
    %71 = vector.load %arg7[%c0_42, %c0_43] : memref<8x1xf32, #tpu.memory_space<vmem>>, vector<8x1xf32>
    %72 = vector.broadcast %71 : vector<8x1xf32> to vector<8x288xf32>
    %73 = arith.addf %70, %72 : vector<8x288xf32>
    %c0_44 = arith.constant 0 : index
    %c0_45 = arith.constant 0 : index
    %c0_46 = arith.constant 0 : index
    %74 = vector.load %arg8[%c0_44, %c0_45, %c0_46] : memref<1x8x288xf32, #tpu.memory_space<vmem>>, vector<1x8x288xf32>
    %75 = vector.shape_cast %74 : vector<1x8x288xf32> to vector<8x288xf32>
    %76 = vector.shape_cast %73 : vector<8x288xf32> to vector<1x8x288xf32>
    tpu.vector_store %arg8[%c0_44, %c0_45, %c0_46], %76 {strides = array<i32>} : memref<1x8x288xf32, #tpu.memory_space<vmem>>, vector<1x8x288xf32>,
    return
  }
  func.func @transform_0(%arg0: i32) -> (i32, i32, i32) {
    %c0_i32 = arith.constant 0 : i32
    %c0_i32_0 = arith.constant 0 : i32
    %c0_i32_1 = arith.constant 0 : i32
    return %arg0, %c0_i32, %c0_i32_0 : i32, i32, i32
  }
  func.func @transform_1(%arg0: i32) -> (i32, i32, i32) {
    %c0_i32 = arith.constant 0 : i32
    %c0_i32_0 = arith.constant 0 : i32
    %c0_i32_1 = arith.constant 0 : i32
    %c0_i32_2 = arith.constant 0 : i32
    return %c0_i32, %c0_i32_0, %c0_i32_1 : i32, i32, i32
  }
  func.func @transform_2(%arg0: i32) -> (i32, i32) {
    %c0_i32 = arith.constant 0 : i32
    %c0_i32_0 = arith.constant 0 : i32
    %c0_i32_1 = arith.constant 0 : i32
    return %c0_i32, %c0_i32_0 : i32, i32
  }
  func.func @transform_3(%arg0: i32) -> (i32, i32) {
    %c0_i32 = arith.constant 0 : i32
    %c0_i32_0 = arith.constant 0 : i32
    %c0_i32_1 = arith.constant 0 : i32
    return %c0_i32, %c0_i32_0 : i32, i32
  }
  func.func @transform_4(%arg0: i32) -> (i32, i32) {
    %c0_i32 = arith.constant 0 : i32
    %c0_i32_0 = arith.constant 0 : i32
    %c0_i32_1 = arith.constant 0 : i32
    return %c0_i32, %c0_i32_0 : i32, i32
  }
  func.func @transform_5(%arg0: i32) -> (i32, i32) {
    %c0_i32 = arith.constant 0 : i32
    %c0_i32_0 = arith.constant 0 : i32
    %c0_i32_1 = arith.constant 0 : i32
    return %c0_i32, %c0_i32_0 : i32, i32
  }
  func.func @transform_6(%arg0: i32) -> (i32, i32) {
    %c0_i32 = arith.constant 0 : i32
    %c0_i32_0 = arith.constant 0 : i32
    %c0_i32_1 = arith.constant 0 : i32
    return %c0_i32, %c0_i32_0 : i32, i32
  }
  func.func @transform_7(%arg0: i32) -> (i32, i32, i32) {
    %c0_i32 = arith.constant 0 : i32
    %c0_i32_0 = arith.constant 0 : i32
    %c0_i32_1 = arith.constant 0 : i32
    return %arg0, %c0_i32, %c0_i32_0 : i32, i32, i32
  }
}

</mosaic_0001>

<llo_original>
// kernel: tpu_custom_call.1
$region0: #{tpu_custom_call.1}
  #allocation0 [shape = 'u32[]', space=smem, size = 0x4, offset = 0x4, fixed_abs, tag = 'smem constant byte address 0x4 - core index']
  #allocation1 [shape = 'u32[144,128]{1,0:T(1,128)}', space=vmem, size = 0x12000, scoped, tag = 'internal scratch']
  %s0 = inlined_call_operand.vmem [shape: f32[2,4,326], index: 0, kind: input, shape index: {}]
  %s1 = inlined_call_operand.vmem [shape: f32[9,8,4], index: 1, kind: input, shape index: {}]
  %s2 = inlined_call_operand.vmem [shape: f32[8,8], index: 2, kind: input, shape index: {}]
  %s3 = inlined_call_operand.vmem [shape: f32[8,1], index: 3, kind: input, shape index: {}]
  %s4 = inlined_call_operand.vmem [shape: f32[8,1], index: 4, kind: input, shape index: {}]
  %s5 = inlined_call_operand.vmem [shape: f32[8,1], index: 5, kind: input, shape index: {}]
  %s6 = inlined_call_operand.vmem [shape: f32[8,1], index: 6, kind: input, shape index: {}]
  %s7 = inlined_call_operand.hbm [shape: f32[2,8,288], index: 7, kind: output, shape index: {}]
  %s8 = sld [smem:[#allocation0]]
  $region61: #{tpu_custom_call.1} parent=0
    _
  %s10 = ssub.s32 1, %s8
  %s11 = scalar_select 0, %s10, %s8
  $region1: #{tpu_custom_call.1} parent=0
    #allocation2 [shape = 'u8[24576]{0}', space=vmem, size = 0x6000, scoped, tag = 'output window, operand 0']
    #allocation3 [shape = 's32[2]{0}', space=sflag, size = 0x8, scoped, tag = 'scoped memory for tpu_custom_call.1']
    %12 = vsyncpa [#allocation3], 0
    %s13 = scalar_lea.sflag [#allocation3], 1
    %14 = vsyncpa %s13, 0
    loop: start=0, step=1, limit=4
    $region2: #{tpu_custom_call.1} parent=1 // loop_pre_header
      _
    $region3: #{tpu_custom_call.1} parent=1 // loop_header
      %s16 = sphi 0, %s20
      %p17 = scmp.ge.s32.totalorder %s16, 4
      %s26 = sphi 0, %s28
      %s29 = sphi 0, %s26
      %s30 = sphi 0, %s29
      %s46 = sphi 0, %s30
      %s50 = sphi 0, %s50
      %s52 = sphi 0, %s50
      %s53 = sphi 0, %s52
      %s67 = sphi 0, %s53
      %s71 = sphi 0, %s71
      %s73 = sphi 0, %s71
      %s74 = sphi 0, %s73
      %s88 = sphi 0, %s74
      %s92 = sphi 0, %s92
      %s94 = sphi 0, %s92
      %s95 = sphi 0, %s94
      %s109 = sphi 0, %s95
      %s113 = sphi 0, %s113
      %s115 = sphi 0, %s113
      %s116 = sphi 0, %s115
      %s130 = sphi 0, %s116
      %s134 = sphi 0, %s134
      %s136 = sphi 0, %s134
      %s137 = sphi 0, %s136
      %s151 = sphi 0, %s137
      %s155 = sphi 0, %s155
      %s157 = sphi 0, %s155
      %s158 = sphi 0, %s157
      %s172 = sphi 0, %s158
      %s178 = sphi 0, %s180
      %s181 = sphi 0, %s178
      %s182 = sphi 0, %s181
      %s198 = sphi 0, %s182
    $region4: #{tpu_custom_call.1} parent=1 // loop_header_branch
      %19 = sbr.rel (%p17) target = $region8
    $region5: #{tpu_custom_call.1} parent=1 // loop_body
      %s21 = ssub.s32 %s16, 1
      %s22 = ssub.s32 %s16, 2
      %s23 = sadd.s32 %s16, 1
      %s24 = ssub.s32 %s16, %s23
      %p25 = scmp.eq.s32.totalorder %s24, 0
      %s27 = sadd.s32 %s26, 1
      %s28 = scalar_select %p25, %s26, %s27
      %p31 = pneg %p25
      %p32 = scmp.eq.s32.totalorder %s16, 1
      %p33 = por %p31, %p32
      %p34 = scmp.ne.s32.totalorder %s26, %s29
      %p35 = scmp.eq.s32.totalorder %s16, 0
      %p36 = por %p34, %p35
      %p37 = scmp.ne.s32.totalorder %s26, %s29
      %p38 = scmp.eq.s32.totalorder %s21, 1
      %p39 = por %p37, %p38
      %p40 = scmp.ne.s32.totalorder %s29, %s30
      %p41 = scmp.eq.s32.totalorder %s21, 0
      %p42 = por %p40, %p41
      %p43 = scmp.ne.s32.totalorder %s29, %s30
      %p44 = scmp.eq.s32.totalorder %s22, 1
      %p45 = por %p43, %p44
      %p47 = scmp.ne.s32.totalorder %s30, %s46
      %p48 = scmp.eq.s32.totalorder %s22, 0
      %p49 = por %p47, %p48
      %s51 = sadd.s32 %s50, 1
      %p54 = scmp.eq.s32.totalorder %s16, 1
      %p55 = scmp.ne.s32.totalorder %s50, %s52
      %p56 = scmp.eq.s32.totalorder %s16, 0
      %p57 = por %p55, %p56
      %p58 = scmp.ne.s32.totalorder %s50, %s52
      %p59 = scmp.eq.s32.totalorder %s21, 1
      %p60 = por %p58, %p59
      %p61 = scmp.ne.s32.totalorder %s52, %s53
      %p62 = scmp.eq.s32.totalorder %s21, 0
      %p63 = por %p61, %p62
      %p64 = scmp.ne.s32.totalorder %s52, %s53
      %p65 = scmp.eq.s32.totalorder %s22, 1
      %p66 = por %p64, %p65
      %p68 = scmp.ne.s32.totalorder %s53, %s67
      %p69 = scmp.eq.s32.totalorder %s22, 0
      %p70 = por %p68, %p69
      %s72 = sadd.s32 %s71, 1
      %p75 = scmp.eq.s32.totalorder %s16, 1
      %p76 = scmp.ne.s32.totalorder %s71, %s73
      %p77 = scmp.eq.s32.totalorder %s16, 0
      %p78 = por %p76, %p77
      %p79 = scmp.ne.s32.totalorder %s71, %s73
      %p80 = scmp.eq.s32.totalorder %s21, 1
      %p81 = por %p79, %p80
      %p82 = scmp.ne.s32.totalorder %s73, %s74
      %p83 = scmp.eq.s32.totalorder %s21, 0
      %p84 = por %p82, %p83
      %p85 = scmp.ne.s32.totalorder %s73, %s74
      %p86 = scmp.eq.s32.totalorder %s22, 1
      %p87 = por %p85, %p86
      %p89 = scmp.ne.s32.totalorder %s74, %s88
      %p90 = scmp.eq.s32.totalorder %s22, 0
      %p91 = por %p89, %p90
      %s93 = sadd.s32 %s92, 1
      %p96 = scmp.eq.s32.totalorder %s16, 1
      %p97 = scmp.ne.s32.totalorder %s92, %s94
      %p98 = scmp.eq.s32.totalorder %s16, 0
      %p99 = por %p97, %p98
      %p100 = scmp.ne.s32.totalorder %s92, %s94
      %p101 = scmp.eq.s32.totalorder %s21, 1
      %p102 = por %p100, %p101
      %p103 = scmp.ne.s32.totalorder %s94, %s95
      %p104 = scmp.eq.s32.totalorder %s21, 0
      %p105 = por %p103, %p104
      %p106 = scmp.ne.s32.totalorder %s94, %s95
      %p107 = scmp.eq.s32.totalorder %s22, 1
      %p108 = por %p106, %p107
      %p110 = scmp.ne.s32.totalorder %s95, %s109
      %p111 = scmp.eq.s32.totalorder %s22, 0
      %p112 = por %p110, %p111
      %s114 = sadd.s32 %s113, 1
      %p117 = scmp.eq.s32.totalorder %s16, 1
      %p118 = scmp.ne.s32.totalorder %s113, %s115
      %p119 = scmp.eq.s32.totalorder %s16, 0
      %p120 = por %p118, %p119
      %p121 = scmp.ne.s32.totalorder %s113, %s115
      %p122 = scmp.eq.s32.totalorder %s21, 1
      %p123 = por %p121, %p122
      %p124 = scmp.ne.s32.totalorder %s115, %s116
      %p125 = scmp.eq.s32.totalorder %s21, 0
      %p126 = por %p124, %p125
      %p127 = scmp.ne.s32.totalorder %s115, %s116
      %p128 = scmp.eq.s32.totalorder %s22, 1
      %p129 = por %p127, %p128
      %p131 = scmp.ne.s32.totalorder %s116, %s130
      %p132 = scmp.eq.s32.totalorder %s22, 0
      %p133 = por %p131, %p132
      %s135 = sadd.s32 %s134, 1
      %p138 = scmp.eq.s32.totalorder %s16, 1
      %p139 = scmp.ne.s32.totalorder %s134, %s136
      %p140 = scmp.eq.s32.totalorder %s16, 0
      %p141 = por %p139, %p140
      %p142 = scmp.ne.s32.totalorder %s134, %s136
      %p143 = scmp.eq.s32.totalorder %s21, 1
      %p144 = por %p142, %p143
      %p145 = scmp.ne.s32.totalorder %s136, %s137
      %p146 = scmp.eq.s32.totalorder %s21, 0
      %p147 = por %p145, %p146
      %p148 = scmp.ne.s32.totalorder %s136, %s137
      %p149 = scmp.eq.s32.totalorder %s22, 1
      %p150 = por %p148, %p149
      %p152 = scmp.ne.s32.totalorder %s137, %s151
      %p153 = scmp.eq.s32.totalorder %s22, 0
      %p154 = por %p152, %p153
      %s156 = sadd.s32 %s155, 1
      %p159 = scmp.eq.s32.totalorder %s16, 1
      %p160 = scmp.ne.s32.totalorder %s155, %s157
      %p161 = scmp.eq.s32.totalorder %s16, 0
      %p162 = por %p160, %p161
      %p163 = scmp.ne.s32.totalorder %s155, %s157
      %p164 = scmp.eq.s32.totalorder %s21, 1
      %p165 = por %p163, %p164
      %p166 = scmp.ne.s32.totalorder %s157, %s158
      %p167 = scmp.eq.s32.totalorder %s21, 0
      %p168 = por %p166, %p167
      %p169 = scmp.ne.s32.totalorder %s157, %s158
      %p170 = scmp.eq.s32.totalorder %s22, 1
      %p171 = por %p169, %p170
      %p173 = scmp.ne.s32.totalorder %s158, %s172
      %p174 = scmp.eq.s32.totalorder %s22, 0
      %p175 = por %p173, %p174
      %s176 = ssub.s32 %s16, %s23
      %p177 = scmp.eq.s32.totalorder %s176, 0
      %s179 = sadd.s32 %s178, 1
      %s180 = scalar_select %p177, %s178, %s179
      %p183 = pneg %p177
      %p184 = scmp.eq.s32.totalorder %s16, 1
      %p185 = por %p183, %p184
      %p186 = scmp.ne.s32.totalorder %s178, %s181
      %p187 = scmp.eq.s32.totalorder %s16, 0
      %p188 = por %p186, %p187
      %p189 = scmp.ne.s32.totalorder %s178, %s181
      %p190 = scmp.eq.s32.totalorder %s21, 1
      %p191 = por %p189, %p190
      %p192 = scmp.ne.s32.totalorder %s181, %s182
      %p193 = scmp.eq.s32.totalorder %s21, 0
      %p194 = por %p192, %p193
      %p195 = scmp.ne.s32.totalorder %s181, %s182
      %p196 = scmp.eq.s32.totalorder %s22, 1
      %p197 = por %p195, %p196
      %p199 = scmp.ne.s32.totalorder %s182, %s198
      %p200 = scmp.eq.s32.totalorder %s22, 0
      %p201 = por %p199, %p200
      %p202 = scmp.le.s32.totalorder 1, %s16
      %p203 = scmp.lt.s32.totalorder %s16, 3
      %p204 = pnand %p202, %p203
      %p205 = pneg %p204
      // Predicated region
      $region9: #{tpu_custom_call.1} parent=5 // pred_check
        _
      $region10: #{tpu_custom_call.1} parent=5 // pred_check_branch
        %207 = sbr.rel (%p204) target = $region12
      $region11: #{tpu_custom_call.1} parent=5 // pred_region
        %s208 = ssub.s32 %s16, 1
        // Predicated region
        $region13: #{tpu_custom_call.1} parent=11 // pred_check
          %p209 = pneg %p63
        $region14: #{tpu_custom_call.1} parent=11 // pred_check_branch
          %211 = sbr.rel (%p209) target = $region16
        $region15: #{tpu_custom_call.1} parent=11 // pred_region
          _
        $region16: #{tpu_custom_call.1} parent=11 // pred_fallthru
          _
        // Predicated region
        $region17: #{tpu_custom_call.1} parent=11 // pred_check
          %p212 = pneg %p84
        $region18: #{tpu_custom_call.1} parent=11 // pred_check_branch
          %214 = sbr.rel (%p212) target = $region20
        $region19: #{tpu_custom_call.1} parent=11 // pred_region
          _
        $region20: #{tpu_custom_call.1} parent=11 // pred_fallthru
          _
        // Predicated region
        $region21: #{tpu_custom_call.1} parent=11 // pred_check
          %p215 = pneg %p105
        $region22: #{tpu_custom_call.1} parent=11 // pred_check_branch
          %217 = sbr.rel (%p215) target = $region24
        $region23: #{tpu_custom_call.1} parent=11 // pred_region
          _
        $region24: #{tpu_custom_call.1} parent=11 // pred_fallthru
          _
        // Predicated region
        $region25: #{tpu_custom_call.1} parent=11 // pred_check
          %p218 = pneg %p126
        $region26: #{tpu_custom_call.1} parent=11 // pred_check_branch
          %220 = sbr.rel (%p218) target = $region28
        $region27: #{tpu_custom_call.1} parent=11 // pred_region
          _
        $region28: #{tpu_custom_call.1} parent=11 // pred_fallthru
          _
        // Predicated region
        $region29: #{tpu_custom_call.1} parent=11 // pred_check
          %p221 = pneg %p147
        $region30: #{tpu_custom_call.1} parent=11 // pred_check_branch
          %223 = sbr.rel (%p221) target = $region32
        $region31: #{tpu_custom_call.1} parent=11 // pred_region
          _
        $region32: #{tpu_custom_call.1} parent=11 // pred_fallthru
          _
        // Predicated region
        $region33: #{tpu_custom_call.1} parent=11 // pred_check
          %p224 = pneg %p168
        $region34: #{tpu_custom_call.1} parent=11 // pred_check_branch
          %226 = sbr.rel (%p224) target = $region36
        $region35: #{tpu_custom_call.1} parent=11 // pred_region
          _
        $region36: #{tpu_custom_call.1} parent=11 // pred_fallthru
          _
      $region12: #{tpu_custom_call.1} parent=5 // pred_fallthru
        _
      %p227 = scmp.lt.s32.totalorder %s16, 2
      // Predicated region
      $region37: #{tpu_custom_call.1} parent=5 // pred_check
        %p228 = pneg %p227
      $region38: #{tpu_custom_call.1} parent=5 // pred_check_branch
        %230 = sbr.rel (%p228) target = $region40
      $region39: #{tpu_custom_call.1} parent=5 // pred_region
        // Predicated region
        $region41: #{tpu_custom_call.1} parent=39 // pred_check
          %p231 = pneg %p36
        $region42: #{tpu_custom_call.1} parent=39 // pred_check_branch
          %233 = sbr.rel (%p231) target = $region44
        $region43: #{tpu_custom_call.1} parent=39 // pred_region
          %p234 = scmp.lt.s32.totalorder %s16, 1
          %s235 = scalar_select %p234, %s16, 1
          %s236 = smul.addr %s235, 3
          %s237 = smul.addr %s236, 4
          %s238 = scalar_lea.vmem %s0, %s237
        $region44: #{tpu_custom_call.1} parent=39 // pred_fallthru
          _
      $region40: #{tpu_custom_call.1} parent=5 // pred_fallthru
        _
      %p239 = scmp.le.s32.totalorder 1, %s16
      %p240 = scmp.lt.s32.totalorder %s16, 3
      %p241 = pnand %p239, %p240
      %p242 = pneg %p241
      // Predicated region
      $region45: #{tpu_custom_call.1} parent=5 // pred_check
        _
      $region46: #{tpu_custom_call.1} parent=5 // pred_check_branch
        %244 = sbr.rel (%p241) target = $region48
      $region47: #{tpu_custom_call.1} parent=5 // pred_region
        %s245 = ssub.s32 %s16, 1
        %p246 = scmp.lt.s32.totalorder %s21, 1
        %s247 = scalar_select %p246, %s21, 1
        %s248 = smul.addr %s247, 3
        %s249 = smul.addr %s248, 4
        %s250 = scalar_lea.vmem %s0, %s249
        %p251 = pneg %p42
        %p252 = pneg %p39
        %p253 = pneg %p63
        %p254 = pneg %p60
        %p255 = pneg %p84
        %p256 = pneg %p81
        %p257 = pneg %p105
        %p258 = pneg %p102
        %p259 = pneg %p126
        %p260 = pneg %p123
        %p261 = pneg %p147
        %p262 = pneg %p144
        %p263 = pneg %p168
        %p264 = pneg %p165
        %p265 = pneg %p194
        %p266 = pneg %p191
        %s267 = sand.u32 %s181, 1
        %s268 = scalar_lea.sflag [#allocation3], %s267
        %s269 = sand.u32 %s181, 1
        %s270 = smul.addr %s269, 24
        %s271 = scalar_lea.vmem [#allocation2], %s270
        %p272 = scmp.lt.s32.totalorder %s21, 1
        %s273 = scalar_select %p272, %s21, 1
        %s274 = smul.addr %s273, 3
        %s275 = smul.addr %s274, 4
        %s276 = scalar_lea.vmem %s0, %s275
        %v277 = vld [vmem:[%s276] sm:$0xff]
        %v278 = vld [vmem:[%s276 + $0x8] sm:$0xf]
        %v279 = vmax.f32 %v277, 0.0
        %v280 = vmax.f32 %v278, 0.0
        %v281 = vand.u32 2147483647, %v277
        %v282 = vand.u32 2147483647, %v278
        %v283 = vsub.f32 0.0, %v281
        %v284 = vsub.f32 0.0, %v282
        %v285 = vmul.f32 %v283, 1.442695
        %v286 = vpow.pop %v285
        %v287 = vmul.f32 %v284, 1.442695
        %v288 = vpow.pop %v287
        %v289 = vadd.f32 %v286, 1.0
        %v290 = vadd.f32 %v288, 1.0
        %v291 = vlog2.pop %v289
        %v292 = vmul.f32 %v291, 0.6931472
        %v293 = vlog2.pop %v290
        %v294 = vmul.f32 %v293, 0.6931472
        %v295 = vadd.f32 %v279, %v292
        %v296 = vadd.f32 %v280, %v294
        %v297 = vtanh.pop %v295
        %v298 = vtanh.pop %v296
        %v299 = vmul.f32 %v277, %v297
        %v300 = vmul.f32 %v278, %v298
        %v301 = vld [vmem:[%s1] sm:$0xff]
        %s302 = scalar_lea.vmem %s1, 8
        %v303 = vld [vmem:[%s302] sm:$0xff]
        %v306 = vcombine.high %v299, %v299
        %307 = vrot.lane.b32.xlu0 %v299, 127
        %v308 = vpop.permute.xlu0 %307
        %309 = vrot.lane.b32.xlu0 %v306, 127
        %v310 = vpop.permute.xlu0 %309
        %311 = vrot.lane.b32.xlu0 %v300, 127
        %v312 = vpop.permute.xlu0 %311
        %vm313 = vcmask 1039360
        %v314 = vsel %vm313, %v308, %v310
        %v315 = vsel %vm313, %v310, %v312
        %vm316 = vcmask 31744
        %v318 = vsel %vm316, %v303, 0
        %vm320 = vcmask 1043456
        %v321 = vsel %vm320, %v314, 0
        %v323 = vsel %vm320, %v315, 0
        %v325 = vsel %vm320, %v312, 0
        %327 = vmatprep.subr.mxu0 %v323
        %328 = vmatpush1.msra.mxu0 %v321
        %329 = vmatprep.subr.mxu0 0.0
        %330 = vmatpush1.msra.mxu0 0.0
        %331 = vmatprep.subr.mxu0 0.0
        %332 = vmatpush1.msra.mxu0 0.0
        %333 = vmatprep.subr.mxu0 0.0
        %334 = vmatpush1.msra.mxu0 0.0
        %335 = vmatprep.subr.mxu0 0.0
        %336 = vmatpush1.msra.mxu0 0.0
        %337 = vmatprep.subr.mxu0 0.0
        %338 = vmatpush1.msra.mxu0 0.0
        %339 = vmatprep.subr.mxu0 0.0
        %340 = vmatpush1.msra.mxu0 0.0
        %341 = vmatprep.subr.mxu0 0.0
        %342 = vmatpush1.msra.mxu0 0.0
        %343 = vmatprep.subr.mxu0 0.0
        %344 = vmatpush1.msra.mxu0 0.0
        %345 = vmatprep.subr.mxu0 0.0
        %346 = vmatpush1.msra.mxu0 0.0
        %347 = vmatprep.subr.mxu0 0.0
        %348 = vmatpush1.msra.mxu0 0.0
        %349 = vmatprep.subr.mxu0 0.0
        %350 = vmatpush1.msra.mxu0 0.0
        %351 = vmatprep.subr.mxu0 0.0
        %352 = vmatpush1.msra.mxu0 0.0
        %353 = vmatprep.subr.mxu0 0.0
        %354 = vmatpush1.msra.mxu0 0.0
        %355 = vmatprep.subr.mxu0 0.0
        %356 = vmatpush1.msra.mxu0 0.0
        %357 = vmatprep.subr.mxu0 0.0
        %358 = vmatpush1.msra.mxu0 0.0
        %359 = vmatprep.subr.mxu0 0.0
        %360 = vmatpush1.msra.mxu0 0.0
        %361 = vmatprep.subr.mxu0 0.0
        %362 = vmatpush1.msra.mxu0 0.0
        %363 = vmatprep.subr.mxu0 0.0
        %364 = vmatpush1.msra.mxu0 0.0
        %365 = vmatprep.subr.mxu0 0.0
        %366 = vmatpush1.msra.mxu0 0.0
        %367 = vmatprep.subr.mxu0 0.0
        %368 = vmatpush1.msra.mxu0 0.0
        %369 = vmatprep.subr.mxu0 0.0
        %370 = vmatpush1.msra.mxu0 0.0
        %371 = vmatprep.subr.mxu0 0.0
        %372 = vmatpush1.msra.mxu0 0.0
        %373 = vmatprep.subr.mxu0 0.0
        %374 = vmatpush1.msra.mxu0 0.0
        %375 = vmatprep.subr.mxu0 0.0
        %376 = vmatpush1.msra.mxu0 0.0
        %377 = vmatprep.subr.mxu0 0.0
        %378 = vmatpush1.msra.mxu0 0.0
        %379 = vmatprep.subr.mxu0 0.0
        %380 = vmatpush1.msra.mxu0 0.0
        %381 = vmatprep.subr.mxu0 0.0
        %382 = vmatpush1.msra.mxu0 0.0
        %383 = vmatprep.subr.mxu0 0.0
        %384 = vmatpush1.msra.mxu0 0.0
        %385 = vmatprep.subr.mxu0 0.0
        %386 = vmatpush1.msra.mxu0 0.0
        %387 = vmatprep.subr.mxu0 0.0
        %388 = vmatpush1.msra.mxu0 0.0
        %389 = vmatprep.subr.mxu0 0.0
        %390 = vmatpush1.msra.mxu0 0.0
        %391 = vmatprep.mubr.f32.mxu0 0.0
        %392 = vmatmul.mubr.f32.gmra.mrb[0].mxu0 %v318
        %v393 = vpop.f32.mrb[0].mxu0
        %v394 = vadd.f32 0.0, %v393
        %v395 = vpop.f32.mrb[0].mxu0
        %v396 = vadd.f32 0.0, %v395
        %397 = vdwg.mxu0
        %398 = vmatprep.subr.mxu0 0.0
        %399 = vmatpush1.msra.mxu0 %v325
        %400 = vmatprep.subr.mxu0 0.0
        %401 = vmatpush1.msra.mxu0 0.0
        %402 = vmatprep.subr.mxu0 0.0
        %403 = vmatpush1.msra.mxu0 0.0
        %404 = vmatprep.subr.mxu0 0.0
        %405 = vmatpush1.msra.mxu0 0.0
        %406 = vmatprep.subr.mxu0 0.0
        %407 = vmatpush1.msra.mxu0 0.0
        %408 = vmatprep.subr.mxu0 0.0
        %409 = vmatpush1.msra.mxu0 0.0
        %410 = vmatprep.subr.mxu0 0.0
        %411 = vmatpush1.msra.mxu0 0.0
        %412 = vmatprep.subr.mxu0 0.0
        %413 = vmatpush1.msra.mxu0 0.0
        %414 = vmatprep.subr.mxu0 0.0
        %415 = vmatpush1.msra.mxu0 0.0
        %416 = vmatprep.subr.mxu0 0.0
        %417 = vmatpush1.msra.mxu0 0.0
        %418 = vmatprep.subr.mxu0 0.0
        %419 = vmatpush1.msra.mxu0 0.0
        %420 = vmatprep.subr.mxu0 0.0
        %421 = vmatpush1.msra.mxu0 0.0
        %422 = vmatprep.subr.mxu0 0.0
        %423 = vmatpush1.msra.mxu0 0.0
        %424 = vmatprep.subr.mxu0 0.0
        %425 = vmatpush1.msra.mxu0 0.0
        %426 = vmatprep.subr.mxu0 0.0
        %427 = vmatpush1.msra.mxu0 0.0
        %428 = vmatprep.subr.mxu0 0.0
        %429 = vmatpush1.msra.mxu0 0.0
        %430 = vmatprep.subr.mxu0 0.0
        %431 = vmatpush1.msra.mxu0 0.0
        %432 = vmatprep.subr.mxu0 0.0
        %433 = vmatpush1.msra.mxu0 0.0
        %434 = vmatprep.subr.mxu0 0.0
        %435 = vmatpush1.msra.mxu0 0.0
        %436 = vmatprep.subr.mxu0 0.0
        %437 = vmatpush1.msra.mxu0 0.0
        %438 = vmatprep.subr.mxu0 0.0
        %439 = vmatpush1.msra.mxu0 0.0
        %440 = vmatprep.subr.mxu0 0.0
        %441 = vmatpush1.msra.mxu0 0.0
        %442 = vmatprep.subr.mxu0 0.0
        %443 = vmatpush1.msra.mxu0 0.0
        %444 = vmatprep.subr.mxu0 0.0
        %445 = vmatpush1.msra.mxu0 0.0
        %446 = vmatprep.subr.mxu0 0.0
        %447 = vmatpush1.msra.mxu0 0.0
        %448 = vmatprep.subr.mxu0 0.0
        %449 = vmatpush1.msra.mxu0 0.0
        %450 = vmatprep.subr.mxu0 0.0
        %451 = vmatpush1.msra.mxu0 0.0
        %452 = vmatprep.subr.mxu0 0.0
        %453 = vmatpush1.msra.mxu0 0.0
        %454 = vmatprep.subr.mxu0 0.0
        %455 = vmatpush1.msra.mxu0 0.0
        %456 = vmatprep.subr.mxu0 0.0
        %457 = vmatpush1.msra.mxu0 0.0
        %458 = vmatprep.subr.mxu0 0.0
        %459 = vmatpush1.msra.mxu0 0.0
        %460 = vmatprep.subr.mxu0 0.0
        %461 = vmatpush1.msra.mxu0 0.0
        %462 = vmatprep.mubr.f32.mxu0 0.0
        %463 = vmatmul.mubr.f32.gmra.mrb[0].mxu0 %v318
        %v464 = vpop.f32.mrb[0].mxu0
        %v465 = vadd.f32 0.0, %v464
        %v466 = vpop.f32.mrb[0].mxu0
        %467 = vdwg.mxu0
        %v469 = vsel %vm316, %v301, 0
        %v471 = vsel %vm320, %v299, 0
        %v473 = vsel %vm320, %v306, 0
        %v475 = vsel %vm320, %v300, 0
        %477 = vmatprep.subr.mxu0 %v473
        %478 = vmatpush1.msra.mxu0 %v471
        %479 = vmatprep.subr.mxu0 0.0
        %480 = vmatpush1.msra.mxu0 0.0
        %481 = vmatprep.subr.mxu0 0.0
        %482 = vmatpush1.msra.mxu0 0.0
        %483 = vmatprep.subr.mxu0 0.0
        %484 = vmatpush1.msra.mxu0 0.0
        %485 = vmatprep.subr.mxu0 0.0
        %486 = vmatpush1.msra.mxu0 0.0
        %487 = vmatprep.subr.mxu0 0.0
        %488 = vmatpush1.msra.mxu0 0.0
        %489 = vmatprep.subr.mxu0 0.0
        %490 = vmatpush1.msra.mxu0 0.0
        %491 = vmatprep.subr.mxu0 0.0
        %492 = vmatpush1.msra.mxu0 0.0
        %493 = vmatprep.subr.mxu0 0.0
        %494 = vmatpush1.msra.mxu0 0.0
        %495 = vmatprep.subr.mxu0 0.0
        %496 = vmatpush1.msra.mxu0 0.0
        %497 = vmatprep.subr.mxu0 0.0
        %498 = vmatpush1.msra.mxu0 0.0
        %499 = vmatprep.subr.mxu0 0.0
        %500 = vmatpush1.msra.mxu0 0.0
        %501 = vmatprep.subr.mxu0 0.0
        %502 = vmatpush1.msra.mxu0 0.0
        %503 = vmatprep.subr.mxu0 0.0
        %504 = vmatpush1.msra.mxu0 0.0
        %505 = vmatprep.subr.mxu0 0.0
        %506 = vmatpush1.msra.mxu0 0.0
        %507 = vmatprep.subr.mxu0 0.0
        %508 = vmatpush1.msra.mxu0 0.0
        %509 = vmatprep.subr.mxu0 0.0
        %510 = vmatpush1.msra.mxu0 0.0
        %511 = vmatprep.subr.mxu0 0.0
        %512 = vmatpush1.msra.mxu0 0.0
        %513 = vmatprep.subr.mxu0 0.0
        %514 = vmatpush1.msra.mxu0 0.0
        %515 = vmatprep.subr.mxu0 0.0
        %516 = vmatpush1.msra.mxu0 0.0
        %517 = vmatprep.subr.mxu0 0.0
        %518 = vmatpush1.msra.mxu0 0.0
        %519 = vmatprep.subr.mxu0 0.0
        %520 = vmatpush1.msra.mxu0 0.0
        %521 = vmatprep.subr.mxu0 0.0
        %522 = vmatpush1.msra.mxu0 0.0
        %523 = vmatprep.subr.mxu0 0.0
        %524 = vmatpush1.msra.mxu0 0.0
        %525 = vmatprep.subr.mxu0 0.0
        %526 = vmatpush1.msra.mxu0 0.0
        %527 = vmatprep.subr.mxu0 0.0
        %528 = vmatpush1.msra.mxu0 0.0
        %529 = vmatprep.subr.mxu0 0.0
        %530 = vmatpush1.msra.mxu0 0.0
        %531 = vmatprep.subr.mxu0 0.0
        %532 = vmatpush1.msra.mxu0 0.0
        %533 = vmatprep.subr.mxu0 0.0
        %534 = vmatpush1.msra.mxu0 0.0
        %535 = vmatprep.subr.mxu0 0.0
        %536 = vmatpush1.msra.mxu0 0.0
        %537 = vmatprep.subr.mxu0 0.0
        %538 = vmatpush1.msra.mxu0 0.0
        %539 = vmatprep.subr.mxu0 0.0
        %540 = vmatpush1.msra.mxu0 0.0
        %541 = vmatprep.mubr.f32.mxu0 0.0
        %542 = vmatmul.mubr.f32.gmra.mrb[0].mxu0 %v469
        %v543 = vpop.f32.mrb[0].mxu0
        %v544 = vadd.f32 %v394, %v543
        %v545 = vpop.f32.mrb[0].mxu0
        %v546 = vadd.f32 %v396, %v545
        %547 = vdwg.mxu0
        %548 = vmatprep.subr.mxu0 0.0
        %549 = vmatpush1.msra.mxu0 %v475
        %550 = vmatprep.subr.mxu0 0.0
        %551 = vmatpush1.msra.mxu0 0.0
        %552 = vmatprep.subr.mxu0 0.0
        %553 = vmatpush1.msra.mxu0 0.0
        %554 = vmatprep.subr.mxu0 0.0
        %555 = vmatpush1.msra.mxu0 0.0
        %556 = vmatprep.subr.mxu0 0.0
        %557 = vmatpush1.msra.mxu0 0.0
        %558 = vmatprep.subr.mxu0 0.0
        %559 = vmatpush1.msra.mxu0 0.0
        %560 = vmatprep.subr.mxu0 0.0
        %561 = vmatpush1.msra.mxu0 0.0
        %562 = vmatprep.subr.mxu0 0.0
        %563 = vmatpush1.msra.mxu0 0.0
        %564 = vmatprep.subr.mxu0 0.0
        %565 = vmatpush1.msra.mxu0 0.0
        %566 = vmatprep.subr.mxu0 0.0
        %567 = vmatpush1.msra.mxu0 0.0
        %568 = vmatprep.subr.mxu0 0.0
        %569 = vmatpush1.msra.mxu0 0.0
        %570 = vmatprep.subr.mxu0 0.0
        %571 = vmatpush1.msra.mxu0 0.0
        %572 = vmatprep.subr.mxu0 0.0
        %573 = vmatpush1.msra.mxu0 0.0
        %574 = vmatprep.subr.mxu0 0.0
        %575 = vmatpush1.msra.mxu0 0.0
        %576 = vmatprep.subr.mxu0 0.0
        %577 = vmatpush1.msra.mxu0 0.0
        %578 = vmatprep.subr.mxu0 0.0
        %579 = vmatpush1.msra.mxu0 0.0
        %580 = vmatprep.subr.mxu0 0.0
        %581 = vmatpush1.msra.mxu0 0.0
        %582 = vmatprep.subr.mxu0 0.0
        %583 = vmatpush1.msra.mxu0 0.0
        %584 = vmatprep.subr.mxu0 0.0
        %585 = vmatpush1.msra.mxu0 0.0
        %586 = vmatprep.subr.mxu0 0.0
        %587 = vmatpush1.msra.mxu0 0.0
        %588 = vmatprep.subr.mxu0 0.0
        %589 = vmatpush1.msra.mxu0 0.0
        %590 = vmatprep.subr.mxu0 0.0
        %591 = vmatpush1.msra.mxu0 0.0
        %592 = vmatprep.subr.mxu0 0.0
        %593 = vmatpush1.msra.mxu0 0.0
        %594 = vmatprep.subr.mxu0 0.0
        %595 = vmatpush1.msra.mxu0 0.0
        %596 = vmatprep.subr.mxu0 0.0
        %597 = vmatpush1.msra.mxu0 0.0
        %598 = vmatprep.subr.mxu0 0.0
        %599 = vmatpush1.msra.mxu0 0.0
        %600 = vmatprep.subr.mxu0 0.0
        %601 = vmatpush1.msra.mxu0 0.0
        %602 = vmatprep.subr.mxu0 0.0
        %603 = vmatpush1.msra.mxu0 0.0
        %604 = vmatprep.subr.mxu0 0.0
        %605 = vmatpush1.msra.mxu0 0.0
        %606 = vmatprep.subr.mxu0 0.0
        %607 = vmatpush1.msra.mxu0 0.0
        %608 = vmatprep.subr.mxu0 0.0
        %609 = vmatpush1.msra.mxu0 0.0
        %610 = vmatprep.subr.mxu0 0.0
        %611 = vmatpush1.msra.mxu0 0.0
        %612 = vmatprep.mubr.f32.mxu0 0.0
        %613 = vmatmul.mubr.f32.gmra.mrb[0].mxu0 %v469
        %v614 = vpop.f32.mrb[0].mxu0
        %v615 = vadd.f32 %v465, %v614
        %v616 = vpop.f32.mrb[0].mxu0
        %617 = vdwg.mxu0
        %s618 = scalar_lea.vmem %s1, 16
        %v619 = vld [vmem:[%s618] sm:$0xff]
        %620 = vrot.lane.b32.xlu0 %v299, 126
        %v621 = vpop.permute.xlu0 %620
        %622 = vrot.lane.b32.xlu0 %v306, 126
        %v623 = vpop.permute.xlu0 %622
        %624 = vrot.lane.b32.xlu0 %v300, 126
        %v625 = vpop.permute.xlu0 %624
        %vm626 = vcmask 1031168
        %v627 = vsel %vm626, %v621, %v623
        %v628 = vsel %vm626, %v623, %v625
        %v630 = vsel %vm316, %v619, 0
        %v632 = vsel %vm320, %v627, 0
        %v634 = vsel %vm320, %v628, 0
        %v636 = vsel %vm320, %v625, 0
        %638 = vmatprep.subr.mxu0 %v634
        %639 = vmatpush1.msra.mxu0 %v632
        %640 = vmatprep.subr.mxu0 0.0
        %641 = vmatpush1.msra.mxu0 0.0
        %642 = vmatprep.subr.mxu0 0.0
        %643 = vmatpush1.msra.mxu0 0.0
        %644 = vmatprep.subr.mxu0 0.0
        %645 = vmatpush1.msra.mxu0 0.0
        %646 = vmatprep.subr.mxu0 0.0
        %647 = vmatpush1.msra.mxu0 0.0
        %648 = vmatprep.subr.mxu0 0.0
        %649 = vmatpush1.msra.mxu0 0.0
        %650 = vmatprep.subr.mxu0 0.0
        %651 = vmatpush1.msra.mxu0 0.0
        %652 = vmatprep.subr.mxu0 0.0
        %653 = vmatpush1.msra.mxu0 0.0
        %654 = vmatprep.subr.mxu0 0.0
        %655 = vmatpush1.msra.mxu0 0.0
        %656 = vmatprep.subr.mxu0 0.0
        %657 = vmatpush1.msra.mxu0 0.0
        %658 = vmatprep.subr.mxu0 0.0
        %659 = vmatpush1.msra.mxu0 0.0
        %660 = vmatprep.subr.mxu0 0.0
        %661 = vmatpush1.msra.mxu0 0.0
        %662 = vmatprep.subr.mxu0 0.0
        %663 = vmatpush1.msra.mxu0 0.0
        %664 = vmatprep.subr.mxu0 0.0
        %665 = vmatpush1.msra.mxu0 0.0
        %666 = vmatprep.subr.mxu0 0.0
        %667 = vmatpush1.msra.mxu0 0.0
        %668 = vmatprep.subr.mxu0 0.0
        %669 = vmatpush1.msra.mxu0 0.0
        %670 = vmatprep.subr.mxu0 0.0
        %671 = vmatpush1.msra.mxu0 0.0
        %672 = vmatprep.subr.mxu0 0.0
        %673 = vmatpush1.msra.mxu0 0.0
        %674 = vmatprep.subr.mxu0 0.0
        %675 = vmatpush1.msra.mxu0 0.0
        %676 = vmatprep.subr.mxu0 0.0
        %677 = vmatpush1.msra.mxu0 0.0
        %678 = vmatprep.subr.mxu0 0.0
        %679 = vmatpush1.msra.mxu0 0.0
        %680 = vmatprep.subr.mxu0 0.0
        %681 = vmatpush1.msra.mxu0 0.0
        %682 = vmatprep.subr.mxu0 0.0
        %683 = vmatpush1.msra.mxu0 0.0
        %684 = vmatprep.subr.mxu0 0.0
        %685 = vmatpush1.msra.mxu0 0.0
        %686 = vmatprep.subr.mxu0 0.0
        %687 = vmatpush1.msra.mxu0 0.0
        %688 = vmatprep.subr.mxu0 0.0
        %689 = vmatpush1.msra.mxu0 0.0
        %690 = vmatprep.subr.mxu0 0.0
        %691 = vmatpush1.msra.mxu0 0.0
        %692 = vmatprep.subr.mxu0 0.0
        %693 = vmatpush1.msra.mxu0 0.0
        %694 = vmatprep.subr.mxu0 0.0
        %695 = vmatpush1.msra.mxu0 0.0
        %696 = vmatprep.subr.mxu0 0.0
        %697 = vmatpush1.msra.mxu0 0.0
        %698 = vmatprep.subr.mxu0 0.0
        %699 = vmatpush1.msra.mxu0 0.0
        %700 = vmatprep.subr.mxu0 0.0
        %701 = vmatpush1.msra.mxu0 0.0
        %702 = vmatprep.mubr.f32.mxu0 0.0
        %703 = vmatmul.mubr.f32.gmra.mrb[0].mxu0 %v630
        %v704 = vpop.f32.mrb[0].mxu0
        %v705 = vadd.f32 0.0, %v704
        %v706 = vpop.f32.mrb[0].mxu0
        %v707 = vadd.f32 0.0, %v706
        %708 = vdwg.mxu0
        %709 = vmatprep.subr.mxu0 0.0
        %710 = vmatpush1.msra.mxu0 %v636
        %711 = vmatprep.subr.mxu0 0.0
        %712 = vmatpush1.msra.mxu0 0.0
        %713 = vmatprep.subr.mxu0 0.0
        %714 = vmatpush1.msra.mxu0 0.0
        %715 = vmatprep.subr.mxu0 0.0
        %716 = vmatpush1.msra.mxu0 0.0
        %717 = vmatprep.subr.mxu0 0.0
        %718 = vmatpush1.msra.mxu0 0.0
        %719 = vmatprep.subr.mxu0 0.0
        %720 = vmatpush1.msra.mxu0 0.0
        %721 = vmatprep.subr.mxu0 0.0
        %722 = vmatpush1.msra.mxu0 0.0
        %723 = vmatprep.subr.mxu0 0.0
        %724 = vmatpush1.msra.mxu0 0.0
        %725 = vmatprep.subr.mxu0 0.0
        %726 = vmatpush1.msra.mxu0 0.0
        %727 = vmatprep.subr.mxu0 0.0
        %728 = vmatpush1.msra.mxu0 0.0
        %729 = vmatprep.subr.mxu0 0.0
        %730 = vmatpush1.msra.mxu0 0.0
        %731 = vmatprep.subr.mxu0 0.0
        %732 = vmatpush1.msra.mxu0 0.0
        %733 = vmatprep.subr.mxu0 0.0
        %734 = vmatpush1.msra.mxu0 0.0
        %735 = vmatprep.subr.mxu0 0.0
        %736 = vmatpush1.msra.mxu0 0.0
        %737 = vmatprep.subr.mxu0 0.0
        %738 = vmatpush1.msra.mxu0 0.0
        %739 = vmatprep.subr.mxu0 0.0
        %740 = vmatpush1.msra.mxu0 0.0
        %741 = vmatprep.subr.mxu0 0.0
        %742 = vmatpush1.msra.mxu0 0.0
        %743 = vmatprep.subr.mxu0 0.0
        %744 = vmatpush1.msra.mxu0 0.0
        %745 = vmatprep.subr.mxu0 0.0
        %746 = vmatpush1.msra.mxu0 0.0
        %747 = vmatprep.subr.mxu0 0.0
        %748 = vmatpush1.msra.mxu0 0.0
        %749 = vmatprep.subr.mxu0 0.0
        %750 = vmatpush1.msra.mxu0 0.0
        %751 = vmatprep.subr.mxu0 0.0
        %752 = vmatpush1.msra.mxu0 0.0
        %753 = vmatprep.subr.mxu0 0.0
        %754 = vmatpush1.msra.mxu0 0.0
        %755 = vmatprep.subr.mxu0 0.0
        %756 = vmatpush1.msra.mxu0 0.0
        %757 = vmatprep.subr.mxu0 0.0
        %758 = vmatpush1.msra.mxu0 0.0
        %759 = vmatprep.subr.mxu0 0.0
        %760 = vmatpush1.msra.mxu0 0.0
        %761 = vmatprep.subr.mxu0 0.0
        %762 = vmatpush1.msra.mxu0 0.0
        %763 = vmatprep.subr.mxu0 0.0
        %764 = vmatpush1.msra.mxu0 0.0
        %765 = vmatprep.subr.mxu0 0.0
        %766 = vmatpush1.msra.mxu0 0.0
        %767 = vmatprep.subr.mxu0 0.0
        %768 = vmatpush1.msra.mxu0 0.0
        %769 = vmatprep.subr.mxu0 0.0
        %770 = vmatpush1.msra.mxu0 0.0
        %771 = vmatprep.subr.mxu0 0.0
        %772 = vmatpush1.msra.mxu0 0.0
        %773 = vmatprep.mubr.f32.mxu0 0.0
        %774 = vmatmul.mubr.f32.gmra.mrb[0].mxu0 %v630
        %v775 = vpop.f32.mrb[0].mxu0
        %v776 = vadd.f32 0.0, %v775
        %v777 = vpop.f32.mrb[0].mxu0
        %778 = vdwg.mxu0
        %v779 = vadd.f32 %v544, %v705
        %v780 = vadd.f32 %v546, %v707
        %v781 = vadd.f32 %v615, %v776
        %s782 = scalar_lea.vmem %s1, 24
        %v783 = vld [vmem:[%s782] sm:$0xff]
        %784 = vrot.lane.b32.xlu0 %v299, 110
        %v785 = vpop.permute.xlu0 %784
        %786 = vrot.lane.b32.xlu0 %v306, 110
        %v787 = vpop.permute.xlu0 %786
        %788 = vrot.lane.b32.xlu0 %v300, 110
        %v789 = vpop.permute.xlu0 %788
        %vm790 = vcmask 900096
        %v791 = vsel %vm790, %v785, %v787
        %v792 = vsel %vm790, %v787, %v789
        %v794 = vsel %vm316, %v783, 0
        %v796 = vsel %vm320, %v791, 0
        %v798 = vsel %vm320, %v792, 0
        %v800 = vsel %vm320, %v789, 0
        %802 = vmatprep.subr.mxu0 %v798
        %803 = vmatpush1.msra.mxu0 %v796
        %804 = vmatprep.subr.mxu0 0.0
        %805 = vmatpush1.msra.mxu0 0.0
        %806 = vmatprep.subr.mxu0 0.0
        %807 = vmatpush1.msra.mxu0 0.0
        %808 = vmatprep.subr.mxu0 0.0
        %809 = vmatpush1.msra.mxu0 0.0
        %810 = vmatprep.subr.mxu0 0.0
        %811 = vmatpush1.msra.mxu0 0.0
        %812 = vmatprep.subr.mxu0 0.0
        %813 = vmatpush1.msra.mxu0 0.0
        %814 = vmatprep.subr.mxu0 0.0
        %815 = vmatpush1.msra.mxu0 0.0
        %816 = vmatprep.subr.mxu0 0.0
        %817 = vmatpush1.msra.mxu0 0.0
        %818 = vmatprep.subr.mxu0 0.0
        %819 = vmatpush1.msra.mxu0 0.0
        %820 = vmatprep.subr.mxu0 0.0
        %821 = vmatpush1.msra.mxu0 0.0
        %822 = vmatprep.subr.mxu0 0.0
        %823 = vmatpush1.msra.mxu0 0.0
        %824 = vmatprep.subr.mxu0 0.0
        %825 = vmatpush1.msra.mxu0 0.0
        %826 = vmatprep.subr.mxu0 0.0
        %827 = vmatpush1.msra.mxu0 0.0
        %828 = vmatprep.subr.mxu0 0.0
        %829 = vmatpush1.msra.mxu0 0.0
        %830 = vmatprep.subr.mxu0 0.0
        %831 = vmatpush1.msra.mxu0 0.0
        %832 = vmatprep.subr.mxu0 0.0
        %833 = vmatpush1.msra.mxu0 0.0
        %834 = vmatprep.subr.mxu0 0.0
        %835 = vmatpush1.msra.mxu0 0.0
        %836 = vmatprep.subr.mxu0 0.0
        %837 = vmatpush1.msra.mxu0 0.0
        %838 = vmatprep.subr.mxu0 0.0
        %839 = vmatpush1.msra.mxu0 0.0
        %840 = vmatprep.subr.mxu0 0.0
        %841 = vmatpush1.msra.mxu0 0.0
        %842 = vmatprep.subr.mxu0 0.0
        %843 = vmatpush1.msra.mxu0 0.0
        %844 = vmatprep.subr.mxu0 0.0
        %845 = vmatpush1.msra.mxu0 0.0
        %846 = vmatprep.subr.mxu0 0.0
        %847 = vmatpush1.msra.mxu0 0.0
        %848 = vmatprep.subr.mxu0 0.0
        %849 = vmatpush1.msra.mxu0 0.0
        %850 = vmatprep.subr.mxu0 0.0
        %851 = vmatpush1.msra.mxu0 0.0
        %852 = vmatprep.subr.mxu0 0.0
        %853 = vmatpush1.msra.mxu0 0.0
        %854 = vmatprep.subr.mxu0 0.0
        %855 = vmatpush1.msra.mxu0 0.0
        %856 = vmatprep.subr.mxu0 0.0
        %857 = vmatpush1.msra.mxu0 0.0
        %858 = vmatprep.subr.mxu0 0.0
        %859 = vmatpush1.msra.mxu0 0.0
        %860 = vmatprep.subr.mxu0 0.0
        %861 = vmatpush1.msra.mxu0 0.0
        %862 = vmatprep.subr.mxu0 0.0
        %863 = vmatpush1.msra.mxu0 0.0
        %864 = vmatprep.subr.mxu0 0.0
        %865 = vmatpush1.msra.mxu0 0.0
        %866 = vmatprep.mubr.f32.mxu0 0.0
        %867 = vmatmul.mubr.f32.gmra.mrb[0].mxu0 %v794
        %v868 = vpop.f32.mrb[0].mxu0
        %v869 = vadd.f32 0.0, %v868
        %v870 = vpop.f32.mrb[0].mxu0
        %v871 = vadd.f32 0.0, %v870
        %872 = vdwg.mxu0
        %873 = vmatprep.subr.mxu0 0.0
        %874 = vmatpush1.msra.mxu0 %v800
        %875 = vmatprep.subr.mxu0 0.0
        %876 = vmatpush1.msra.mxu0 0.0
        %877 = vmatprep.subr.mxu0 0.0
        %878 = vmatpush1.msra.mxu0 0.0
        %879 = vmatprep.subr.mxu0 0.0
        %880 = vmatpush1.msra.mxu0 0.0
        %881 = vmatprep.subr.mxu0 0.0
        %882 = vmatpush1.msra.mxu0 0.0
        %883 = vmatprep.subr.mxu0 0.0
        %884 = vmatpush1.msra.mxu0 0.0
        %885 = vmatprep.subr.mxu0 0.0
        %886 = vmatpush1.msra.mxu0 0.0
        %887 = vmatprep.subr.mxu0 0.0
        %888 = vmatpush1.msra.mxu0 0.0
        %889 = vmatprep.subr.mxu0 0.0
        %890 = vmatpush1.msra.mxu0 0.0
        %891 = vmatprep.subr.mxu0 0.0
        %892 = vmatpush1.msra.mxu0 0.0
        %893 = vmatprep.subr.mxu0 0.0
        %894 = vmatpush1.msra.mxu0 0.0
        %895 = vmatprep.subr.mxu0 0.0
        %896 = vmatpush1.msra.mxu0 0.0
        %897 = vmatprep.subr.mxu0 0.0
        %898 = vmatpush1.msra.mxu0 0.0
        %899 = vmatprep.subr.mxu0 0.0
        %900 = vmatpush1.msra.mxu0 0.0
        %901 = vmatprep.subr.mxu0 0.0
        %902 = vmatpush1.msra.mxu0 0.0
        %903 = vmatprep.subr.mxu0 0.0
        %904 = vmatpush1.msra.mxu0 0.0
        %905 = vmatprep.subr.mxu0 0.0
        %906 = vmatpush1.msra.mxu0 0.0
        %907 = vmatprep.subr.mxu0 0.0
        %908 = vmatpush1.msra.mxu0 0.0
        %909 = vmatprep.subr.mxu0 0.0
        %910 = vmatpush1.msra.mxu0 0.0
        %911 = vmatprep.subr.mxu0 0.0
        %912 = vmatpush1.msra.mxu0 0.0
        %913 = vmatprep.subr.mxu0 0.0
        %914 = vmatpush1.msra.mxu0 0.0
        %915 = vmatprep.subr.mxu0 0.0
        %916 = vmatpush1.msra.mxu0 0.0
        %917 = vmatprep.subr.mxu0 0.0
        %918 = vmatpush1.msra.mxu0 0.0
        %919 = vmatprep.subr.mxu0 0.0
        %920 = vmatpush1.msra.mxu0 0.0
        %921 = vmatprep.subr.mxu0 0.0
        %922 = vmatpush1.msra.mxu0 0.0
        %923 = vmatprep.subr.mxu0 0.0
        %924 = vmatpush1.msra.mxu0 0.0
        %925 = vmatprep.subr.mxu0 0.0
        %926 = vmatpush1.msra.mxu0 0.0
        %927 = vmatprep.subr.mxu0 0.0
        %928 = vmatpush1.msra.mxu0 0.0
        %929 = vmatprep.subr.mxu0 0.0
        %930 = vmatpush1.msra.mxu0 0.0
        %931 = vmatprep.subr.mxu0 0.0
        %932 = vmatpush1.msra.mxu0 0.0
        %933 = vmatprep.subr.mxu0 0.0
        %934 = vmatpush1.msra.mxu0 0.0
        %935 = vmatprep.subr.mxu0 0.0
        %936 = vmatpush1.msra.mxu0 0.0
        %937 = vmatprep.mubr.f32.mxu0 0.0
        %938 = vmatmul.mubr.f32.gmra.mrb[0].mxu0 %v794
        %v939 = vpop.f32.mrb[0].mxu0
        %v940 = vadd.f32 0.0, %v939
        %v941 = vpop.f32.mrb[0].mxu0
        %942 = vdwg.mxu0
        %v943 = vadd.f32 %v779, %v869
        %v944 = vadd.f32 %v780, %v871
        %v945 = vadd.f32 %v781, %v940
        %s946 = scalar_lea.vmem %s1, 32
        %v947 = vld [vmem:[%s946] sm:$0xff]
        %948 = vrot.lane.b32.xlu0 %v299, 109
        %v949 = vpop.permute.xlu0 %948
        %950 = vrot.lane.b32.xlu0 %v306, 109
        %v951 = vpop.permute.xlu0 %950
        %952 = vrot.lane.b32.xlu0 %v300, 109
        %v953 = vpop.permute.xlu0 %952
        %vm954 = vcmask 891904
        %v955 = vsel %vm954, %v949, %v951
        %v956 = vsel %vm954, %v951, %v953
        %v958 = vsel %vm316, %v947, 0
        %v960 = vsel %vm320, %v955, 0
        %v962 = vsel %vm320, %v956, 0
        %v964 = vsel %vm320, %v953, 0
        %966 = vmatprep.subr.mxu0 %v962
        %967 = vmatpush1.msra.mxu0 %v960
        %968 = vmatprep.subr.mxu0 0.0
        %969 = vmatpush1.msra.mxu0 0.0
        %970 = vmatprep.subr.mxu0 0.0
        %971 = vmatpush1.msra.mxu0 0.0
        %972 = vmatprep.subr.mxu0 0.0
        %973 = vmatpush1.msra.mxu0 0.0
        %974 = vmatprep.subr.mxu0 0.0
        %975 = vmatpush1.msra.mxu0 0.0
        %976 = vmatprep.subr.mxu0 0.0
        %977 = vmatpush1.msra.mxu0 0.0
        %978 = vmatprep.subr.mxu0 0.0
        %979 = vmatpush1.msra.mxu0 0.0
        %980 = vmatprep.subr.mxu0 0.0
        %981 = vmatpush1.msra.mxu0 0.0
        %982 = vmatprep.subr.mxu0 0.0
        %983 = vmatpush1.msra.mxu0 0.0
        %984 = vmatprep.subr.mxu0 0.0
        %985 = vmatpush1.msra.mxu0 0.0
        %986 = vmatprep.subr.mxu0 0.0
        %987 = vmatpush1.msra.mxu0 0.0
        %988 = vmatprep.subr.mxu0 0.0
        %989 = vmatpush1.msra.mxu0 0.0
        %990 = vmatprep.subr.mxu0 0.0
        %991 = vmatpush1.msra.mxu0 0.0
        %992 = vmatprep.subr.mxu0 0.0
        %993 = vmatpush1.msra.mxu0 0.0
        %994 = vmatprep.subr.mxu0 0.0
        %995 = vmatpush1.msra.mxu0 0.0
        %996 = vmatprep.subr.mxu0 0.0
        %997 = vmatpush1.msra.mxu0 0.0
        %998 = vmatprep.subr.mxu0 0.0
        %999 = vmatpush1.msra.mxu0 0.0
        %1000 = vmatprep.subr.mxu0 0.0
        %1001 = vmatpush1.msra.mxu0 0.0
        %1002 = vmatprep.subr.mxu0 0.0
        %1003 = vmatpush1.msra.mxu0 0.0
        %1004 = vmatprep.subr.mxu0 0.0
        %1005 = vmatpush1.msra.mxu0 0.0
        %1006 = vmatprep.subr.mxu0 0.0
        %1007 = vmatpush1.msra.mxu0 0.0
        %1008 = vmatprep.subr.mxu0 0.0
        %1009 = vmatpush1.msra.mxu0 0.0
        %1010 = vmatprep.subr.mxu0 0.0
        %1011 = vmatpush1.msra.mxu0 0.0
        %1012 = vmatprep.subr.mxu0 0.0
        %1013 = vmatpush1.msra.mxu0 0.0
        %1014 = vmatprep.subr.mxu0 0.0
        %1015 = vmatpush1.msra.mxu0 0.0
        %1016 = vmatprep.subr.mxu0 0.0
        %1017 = vmatpush1.msra.mxu0 0.0
        %1018 = vmatprep.subr.mxu0 0.0
        %1019 = vmatpush1.msra.mxu0 0.0
        %1020 = vmatprep.subr.mxu0 0.0
        %1021 = vmatpush1.msra.mxu0 0.0
        %1022 = vmatprep.subr.mxu0 0.0
        %1023 = vmatpush1.msra.mxu0 0.0
        %1024 = vmatprep.subr.mxu0 0.0
        %1025 = vmatpush1.msra.mxu0 0.0
        %1026 = vmatprep.subr.mxu0 0.0
        %1027 = vmatpush1.msra.mxu0 0.0
        %1028 = vmatprep.subr.mxu0 0.0
        %1029 = vmatpush1.msra.mxu0 0.0
        %1030 = vmatprep.mubr.f32.mxu0 0.0
        %1031 = vmatmul.mubr.f32.gmra.mrb[0].mxu0 %v958
        %v1032 = vpop.f32.mrb[0].mxu0
        %v1033 = vadd.f32 0.0, %v1032
        %v1034 = vpop.f32.mrb[0].mxu0
        %v1035 = vadd.f32 0.0, %v1034
        %1036 = vdwg.mxu0
        %1037 = vmatprep.subr.mxu0 0.0
        %1038 = vmatpush1.msra.mxu0 %v964
        %1039 = vmatprep.subr.mxu0 0.0
        %1040 = vmatpush1.msra.mxu0 0.0
        %1041 = vmatprep.subr.mxu0 0.0
        %1042 = vmatpush1.msra.mxu0 0.0
        %1043 = vmatprep.subr.mxu0 0.0
        %1044 = vmatpush1.msra.mxu0 0.0
        %1045 = vmatprep.subr.mxu0 0.0
        %1046 = vmatpush1.msra.mxu0 0.0
        %1047 = vmatprep.subr.mxu0 0.0
        %1048 = vmatpush1.msra.mxu0 0.0
        %1049 = vmatprep.subr.mxu0 0.0
        %1050 = vmatpush1.msra.mxu0 0.0
        %1051 = vmatprep.subr.mxu0 0.0
        %1052 = vmatpush1.msra.mxu0 0.0
        %1053 = vmatprep.subr.mxu0 0.0
        %1054 = vmatpush1.msra.mxu0 0.0
        %1055 = vmatprep.subr.mxu0 0.0
        %1056 = vmatpush1.msra.mxu0 0.0
        %1057 = vmatprep.subr.mxu0 0.0
        %1058 = vmatpush1.msra.mxu0 0.0
        %1059 = vmatprep.subr.mxu0 0.0
        %1060 = vmatpush1.msra.mxu0 0.0
        %1061 = vmatprep.subr.mxu0 0.0
        %1062 = vmatpush1.msra.mxu0 0.0
        %1063 = vmatprep.subr.mxu0 0.0
        %1064 = vmatpush1.msra.mxu0 0.0
        %1065 = vmatprep.subr.mxu0 0.0
        %1066 = vmatpush1.msra.mxu0 0.0
        %1067 = vmatprep.subr.mxu0 0.0
        %1068 = vmatpush1.msra.mxu0 0.0
        %1069 = vmatprep.subr.mxu0 0.0
        %1070 = vmatpush1.msra.mxu0 0.0
        %1071 = vmatprep.subr.mxu0 0.0
        %1072 = vmatpush1.msra.mxu0 0.0
        %1073 = vmatprep.subr.mxu0 0.0
        %1074 = vmatpush1.msra.mxu0 0.0
        %1075 = vmatprep.subr.mxu0 0.0
        %1076 = vmatpush1.msra.mxu0 0.0
        %1077 = vmatprep.subr.mxu0 0.0
        %1078 = vmatpush1.msra.mxu0 0.0
        %1079 = vmatprep.subr.mxu0 0.0
        %1080 = vmatpush1.msra.mxu0 0.0
        %1081 = vmatprep.subr.mxu0 0.0
        %1082 = vmatpush1.msra.mxu0 0.0
        %1083 = vmatprep.subr.mxu0 0.0
        %1084 = vmatpush1.msra.mxu0 0.0
        %1085 = vmatprep.subr.mxu0 0.0
        %1086 = vmatpush1.msra.mxu0 0.0
        %1087 = vmatprep.subr.mxu0 0.0
        %1088 = vmatpush1.msra.mxu0 0.0
        %1089 = vmatprep.subr.mxu0 0.0
        %1090 = vmatpush1.msra.mxu0 0.0
        %1091 = vmatprep.subr.mxu0 0.0
        %1092 = vmatpush1.msra.mxu0 0.0
        %1093 = vmatprep.subr.mxu0 0.0
        %1094 = vmatpush1.msra.mxu0 0.0
        %1095 = vmatprep.subr.mxu0 0.0
        %1096 = vmatpush1.msra.mxu0 0.0
        %1097 = vmatprep.subr.mxu0 0.0
        %1098 = vmatpush1.msra.mxu0 0.0
        %1099 = vmatprep.subr.mxu0 0.0
        %1100 = vmatpush1.msra.mxu0 0.0
        %1101 = vmatprep.mubr.f32.mxu0 0.0
        %1102 = vmatmul.mubr.f32.gmra.mrb[0].mxu0 %v958
        %v1103 = vpop.f32.mrb[0].mxu0
        %v1104 = vadd.f32 0.0, %v1103
        %v1105 = vpop.f32.mrb[0].mxu0
        %1106 = vdwg.mxu0
        %v1107 = vadd.f32 %v943, %v1033
        %v1108 = vadd.f32 %v944, %v1035
        %v1109 = vadd.f32 %v945, %v1104
        %s1110 = scalar_lea.vmem %s1, 40
        %v1111 = vld [vmem:[%s1110] sm:$0xff]
        %1112 = vrot.lane.b32.xlu0 %v299, 108
        %v1113 = vpop.permute.xlu0 %1112
        %1114 = vrot.lane.b32.xlu0 %v306, 108
        %v1115 = vpop.permute.xlu0 %1114
        %1116 = vrot.lane.b32.xlu0 %v300, 108
        %v1117 = vpop.permute.xlu0 %1116
        %vm1118 = vcmask 883712
        %v1119 = vsel %vm1118, %v1113, %v1115
        %v1120 = vsel %vm1118, %v1115, %v1117
        %v1122 = vsel %vm316, %v1111, 0
        %v1124 = vsel %vm320, %v1119, 0
        %v1126 = vsel %vm320, %v1120, 0
        %v1128 = vsel %vm320, %v1117, 0
        %1130 = vmatprep.subr.mxu0 %v1126
        %1131 = vmatpush1.msra.mxu0 %v1124
        %1132 = vmatprep.subr.mxu0 0.0
        %1133 = vmatpush1.msra.mxu0 0.0
        %1134 = vmatprep.subr.mxu0 0.0
        %1135 = vmatpush1.msra.mxu0 0.0
        %1136 = vmatprep.subr.mxu0 0.0
        %1137 = vmatpush1.msra.mxu0 0.0
        %1138 = vmatprep.subr.mxu0 0.0
        %1139 = vmatpush1.msra.mxu0 0.0
        %1140 = vmatprep.subr.mxu0 0.0
        %1141 = vmatpush1.msra.mxu0 0.0
        %1142 = vmatprep.subr.mxu0 0.0
        %1143 = vmatpush1.msra.mxu0 0.0
        %1144 = vmatprep.subr.mxu0 0.0
        %1145 = vmatpush1.msra.mxu0 0.0
        %1146 = vmatprep.subr.mxu0 0.0
        %1147 = vmatpush1.msra.mxu0 0.0
        %1148 = vmatprep.subr.mxu0 0.0
        %1149 = vmatpush1.msra.mxu0 0.0
        %1150 = vmatprep.subr.mxu0 0.0
        %1151 = vmatpush1.msra.mxu0 0.0
        %1152 = vmatprep.subr.mxu0 0.0
        %1153 = vmatpush1.msra.mxu0 0.0
        %1154 = vmatprep.subr.mxu0 0.0
        %1155 = vmatpush1.msra.mxu0 0.0
        %1156 = vmatprep.subr.mxu0 0.0
        %1157 = vmatpush1.msra.mxu0 0.0
        %1158 = vmatprep.subr.mxu0 0.0
        %1159 = vmatpush1.msra.mxu0 0.0
        %1160 = vmatprep.subr.mxu0 0.0
        %1161 = vmatpush1.msra.mxu0 0.0
        %1162 = vmatprep.subr.mxu0 0.0
        %1163 = vmatpush1.msra.mxu0 0.0
        %1164 = vmatprep.subr.mxu0 0.0
        %1165 = vmatpush1.msra.mxu0 0.0
        %1166 = vmatprep.subr.mxu0 0.0
        %1167 = vmatpush1.msra.mxu0 0.0
        %1168 = vmatprep.subr.mxu0 0.0
        %1169 = vmatpush1.msra.mxu0 0.0
        %1170 = vmatprep.subr.mxu0 0.0
        %1171 = vmatpush1.msra.mxu0 0.0
        %1172 = vmatprep.subr.mxu0 0.0
        %1173 = vmatpush1.msra.mxu0 0.0
        %1174 = vmatprep.subr.mxu0 0.0
        %1175 = vmatpush1.msra.mxu0 0.0
        %1176 = vmatprep.subr.mxu0 0.0
        %1177 = vmatpush1.msra.mxu0 0.0
        %1178 = vmatprep.subr.mxu0 0.0
        %1179 = vmatpush1.msra.mxu0 0.0
        %1180 = vmatprep.subr.mxu0 0.0
        %1181 = vmatpush1.msra.mxu0 0.0
        %1182 = vmatprep.subr.mxu0 0.0
        %1183 = vmatpush1.msra.mxu0 0.0
        %1184 = vmatprep.subr.mxu0 0.0
        %1185 = vmatpush1.msra.mxu0 0.0
        %1186 = vmatprep.subr.mxu0 0.0
        %1187 = vmatpush1.msra.mxu0 0.0
        %1188 = vmatprep.subr.mxu0 0.0
        %1189 = vmatpush1.msra.mxu0 0.0
        %1190 = vmatprep.subr.mxu0 0.0
        %1191 = vmatpush1.msra.mxu0 0.0
        %1192 = vmatprep.subr.mxu0 0.0
        %1193 = vmatpush1.msra.mxu0 0.0
        %1194 = vmatprep.mubr.f32.mxu0 0.0
        %1195 = vmatmul.mubr.f32.gmra.mrb[0].mxu0 %v1122
        %v1196 = vpop.f32.mrb[0].mxu0
        %v1197 = vadd.f32 0.0, %v1196
        %v1198 = vpop.f32.mrb[0].mxu0
        %v1199 = vadd.f32 0.0, %v1198
        %1200 = vdwg.mxu0
        %1201 = vmatprep.subr.mxu0 0.0
        %1202 = vmatpush1.msra.mxu0 %v1128
        %1203 = vmatprep.subr.mxu0 0.0
        %1204 = vmatpush1.msra.mxu0 0.0
        %1205 = vmatprep.subr.mxu0 0.0
        %1206 = vmatpush1.msra.mxu0 0.0
        %1207 = vmatprep.subr.mxu0 0.0
        %1208 = vmatpush1.msra.mxu0 0.0
        %1209 = vmatprep.subr.mxu0 0.0
        %1210 = vmatpush1.msra.mxu0 0.0
        %1211 = vmatprep.subr.mxu0 0.0
        %1212 = vmatpush1.msra.mxu0 0.0
        %1213 = vmatprep.subr.mxu0 0.0
        %1214 = vmatpush1.msra.mxu0 0.0
        %1215 = vmatprep.subr.mxu0 0.0
        %1216 = vmatpush1.msra.mxu0 0.0
        %1217 = vmatprep.subr.mxu0 0.0
        %1218 = vmatpush1.msra.mxu0 0.0
        %1219 = vmatprep.subr.mxu0 0.0
        %1220 = vmatpush1.msra.mxu0 0.0
        %1221 = vmatprep.subr.mxu0 0.0
        %1222 = vmatpush1.msra.mxu0 0.0
        %1223 = vmatprep.subr.mxu0 0.0
        %1224 = vmatpush1.msra.mxu0 0.0
        %1225 = vmatprep.subr.mxu0 0.0
        %1226 = vmatpush1.msra.mxu0 0.0
        %1227 = vmatprep.subr.mxu0 0.0
        %1228 = vmatpush1.msra.mxu0 0.0
        %1229 = vmatprep.subr.mxu0 0.0
        %1230 = vmatpush1.msra.mxu0 0.0
        %1231 = vmatprep.subr.mxu0 0.0
        %1232 = vmatpush1.msra.mxu0 0.0
        %1233 = vmatprep.subr.mxu0 0.0
        %1234 = vmatpush1.msra.mxu0 0.0
        %1235 = vmatprep.subr.mxu0 0.0
        %1236 = vmatpush1.msra.mxu0 0.0
        %1237 = vmatprep.subr.mxu0 0.0
        %1238 = vmatpush1.msra.mxu0 0.0
        %1239 = vmatprep.subr.mxu0 0.0
        %1240 = vmatpush1.msra.mxu0 0.0
        %1241 = vmatprep.subr.mxu0 0.0
        %1242 = vmatpush1.msra.mxu0 0.0
        %1243 = vmatprep.subr.mxu0 0.0
        %1244 = vmatpush1.msra.mxu0 0.0
        %1245 = vmatprep.subr.mxu0 0.0
        %1246 = vmatpush1.msra.mxu0 0.0
        %1247 = vmatprep.subr.mxu0 0.0
        %1248 = vmatpush1.msra.mxu0 0.0
        %1249 = vmatprep.subr.mxu0 0.0
        %1250 = vmatpush1.msra.mxu0 0.0
        %1251 = vmatprep.subr.mxu0 0.0
        %1252 = vmatpush1.msra.mxu0 0.0
        %1253 = vmatprep.subr.mxu0 0.0
        %1254 = vmatpush1.msra.mxu0 0.0
        %1255 = vmatprep.subr.mxu0 0.0
        %1256 = vmatpush1.msra.mxu0 0.0
        %1257 = vmatprep.subr.mxu0 0.0
        %1258 = vmatpush1.msra.mxu0 0.0
        %1259 = vmatprep.subr.mxu0 0.0
        %1260 = vmatpush1.msra.mxu0 0.0
        %1261 = vmatprep.subr.mxu0 0.0
        %1262 = vmatpush1.msra.mxu0 0.0
        %1263 = vmatprep.subr.mxu0 0.0
        %1264 = vmatpush1.msra.mxu0 0.0
        %1265 = vmatprep.mubr.f32.mxu0 0.0
        %1266 = vmatmul.mubr.f32.gmra.mrb[0].mxu0 %v1122
        %v1267 = vpop.f32.mrb[0].mxu0
        %v1268 = vadd.f32 0.0, %v1267
        %v1269 = vpop.f32.mrb[0].mxu0
        %1270 = vdwg.mxu0
        %v1271 = vadd.f32 %v1107, %v1197
        %v1272 = vadd.f32 %v1108, %v1199
        %v1273 = vadd.f32 %v1109, %v1268
        %s1274 = scalar_lea.vmem %s1, 48
        %v1275 = vld [vmem:[%s1274] sm:$0xff]
        %1276 = vrot.lane.b32.xlu0 %v299, 92
        %v1277 = vpop.permute.xlu0 %1276
        %1278 = vrot.lane.b32.xlu0 %v306, 92
        %v1279 = vpop.permute.xlu0 %1278
        %1280 = vrot.lane.b32.xlu0 %v300, 92
        %v1281 = vpop.permute.xlu0 %1280
        %vm1282 = vcmask 752640
        %v1283 = vsel %vm1282, %v1277, %v1279
        %v1284 = vsel %vm1282, %v1279, %v1281
        %v1286 = vsel %vm316, %v1275, 0
        %v1288 = vsel %vm320, %v1283, 0
        %v1290 = vsel %vm320, %v1284, 0
        %v1292 = vsel %vm320, %v1281, 0
        %1294 = vmatprep.subr.mxu0 %v1290
        %1295 = vmatpush1.msra.mxu0 %v1288
        %1296 = vmatprep.subr.mxu0 0.0
        %1297 = vmatpush1.msra.mxu0 0.0
        %1298 = vmatprep.subr.mxu0 0.0
        %1299 = vmatpush1.msra.mxu0 0.0
        %1300 = vmatprep.subr.mxu0 0.0
        %1301 = vmatpush1.msra.mxu0 0.0
        %1302 = vmatprep.subr.mxu0 0.0
        %1303 = vmatpush1.msra.mxu0 0.0
        %1304 = vmatprep.subr.mxu0 0.0
        %1305 = vmatpush1.msra.mxu0 0.0
        %1306 = vmatprep.subr.mxu0 0.0
        %1307 = vmatpush1.msra.mxu0 0.0
        %1308 = vmatprep.subr.mxu0 0.0
        %1309 = vmatpush1.msra.mxu0 0.0
        %1310 = vmatprep.subr.mxu0 0.0
        %1311 = vmatpush1.msra.mxu0 0.0
        %1312 = vmatprep.subr.mxu0 0.0
        %1313 = vmatpush1.msra.mxu0 0.0
        %1314 = vmatprep.subr.mxu0 0.0
        %1315 = vmatpush1.msra.mxu0 0.0
        %1316 = vmatprep.subr.mxu0 0.0
        %1317 = vmatpush1.msra.mxu0 0.0
        %1318 = vmatprep.subr.mxu0 0.0
        %1319 = vmatpush1.msra.mxu0 0.0
        %1320 = vmatprep.subr.mxu0 0.0
        %1321 = vmatpush1.msra.mxu0 0.0
        %1322 = vmatprep.subr.mxu0 0.0
        %1323 = vmatpush1.msra.mxu0 0.0
        %1324 = vmatprep.subr.mxu0 0.0
        %1325 = vmatpush1.msra.mxu0 0.0
        %1326 = vmatprep.subr.mxu0 0.0
        %1327 = vmatpush1.msra.mxu0 0.0
        %1328 = vmatprep.subr.mxu0 0.0
        %1329 = vmatpush1.msra.mxu0 0.0
        %1330 = vmatprep.subr.mxu0 0.0
        %1331 = vmatpush1.msra.mxu0 0.0
        %1332 = vmatprep.subr.mxu0 0.0
        %1333 = vmatpush1.msra.mxu0 0.0
        %1334 = vmatprep.subr.mxu0 0.0
        %1335 = vmatpush1.msra.mxu0 0.0
        %1336 = vmatprep.subr.mxu0 0.0
        %1337 = vmatpush1.msra.mxu0 0.0
        %1338 = vmatprep.subr.mxu0 0.0
        %1339 = vmatpush1.msra.mxu0 0.0
        %1340 = vmatprep.subr.mxu0 0.0
        %1341 = vmatpush1.msra.mxu0 0.0
        %1342 = vmatprep.subr.mxu0 0.0
        %1343 = vmatpush1.msra.mxu0 0.0
        %1344 = vmatprep.subr.mxu0 0.0
        %1345 = vmatpush1.msra.mxu0 0.0
        %1346 = vmatprep.subr.mxu0 0.0
        %1347 = vmatpush1.msra.mxu0 0.0
        %1348 = vmatprep.subr.mxu0 0.0
        %1349 = vmatpush1.msra.mxu0 0.0
        %1350 = vmatprep.subr.mxu0 0.0
        %1351 = vmatpush1.msra.mxu0 0.0
        %1352 = vmatprep.subr.mxu0 0.0
        %1353 = vmatpush1.msra.mxu0 0.0
        %1354 = vmatprep.subr.mxu0 0.0
        %1355 = vmatpush1.msra.mxu0 0.0
        %1356 = vmatprep.subr.mxu0 0.0
        %1357 = vmatpush1.msra.mxu0 0.0
        %1358 = vmatprep.mubr.f32.mxu0 0.0
        %1359 = vmatmul.mubr.f32.gmra.mrb[0].mxu0 %v1286
        %v1360 = vpop.f32.mrb[0].mxu0
        %v1361 = vadd.f32 0.0, %v1360
        %v1362 = vpop.f32.mrb[0].mxu0
        %v1363 = vadd.f32 0.0, %v1362
        %1364 = vdwg.mxu0
        %1365 = vmatprep.subr.mxu0 0.0
        %1366 = vmatpush1.msra.mxu0 %v1292
        %1367 = vmatprep.subr.mxu0 0.0
        %1368 = vmatpush1.msra.mxu0 0.0
        %1369 = vmatprep.subr.mxu0 0.0
        %1370 = vmatpush1.msra.mxu0 0.0
        %1371 = vmatprep.subr.mxu0 0.0
        %1372 = vmatpush1.msra.mxu0 0.0
        %1373 = vmatprep.subr.mxu0 0.0
        %1374 = vmatpush1.msra.mxu0 0.0
        %1375 = vmatprep.subr.mxu0 0.0
        %1376 = vmatpush1.msra.mxu0 0.0
        %1377 = vmatprep.subr.mxu0 0.0
        %1378 = vmatpush1.msra.mxu0 0.0
        %1379 = vmatprep.subr.mxu0 0.0
        %1380 = vmatpush1.msra.mxu0 0.0
        %1381 = vmatprep.subr.mxu0 0.0
        %1382 = vmatpush1.msra.mxu0 0.0
        %1383 = vmatprep.subr.mxu0 0.0
        %1384 = vmatpush1.msra.mxu0 0.0
        %1385 = vmatprep.subr.mxu0 0.0
        %1386 = vmatpush1.msra.mxu0 0.0
        %1387 = vmatprep.subr.mxu0 0.0
        %1388 = vmatpush1.msra.mxu0 0.0
        %1389 = vmatprep.subr.mxu0 0.0
        %1390 = vmatpush1.msra.mxu0 0.0
        %1391 = vmatprep.subr.mxu0 0.0
        %1392 = vmatpush1.msra.mxu0 0.0
        %1393 = vmatprep.subr.mxu0 0.0
        %1394 = vmatpush1.msra.mxu0 0.0
        %1395 = vmatprep.subr.mxu0 0.0
        %1396 = vmatpush1.msra.mxu0 0.0
        %1397 = vmatprep.subr.mxu0 0.0
        %1398 = vmatpush1.msra.mxu0 0.0
        %1399 = vmatprep.subr.mxu0 0.0
        %1400 = vmatpush1.msra.mxu0 0.0
        %1401 = vmatprep.subr.mxu0 0.0
        %1402 = vmatpush1.msra.mxu0 0.0
        %1403 = vmatprep.subr.mxu0 0.0
        %1404 = vmatpush1.msra.mxu0 0.0
        %1405 = vmatprep.subr.mxu0 0.0
        %1406 = vmatpush1.msra.mxu0 0.0
        %1407 = vmatprep.subr.mxu0 0.0
        %1408 = vmatpush1.msra.mxu0 0.0
        %1409 = vmatprep.subr.mxu0 0.0
        %1410 = vmatpush1.msra.mxu0 0.0
        %1411 = vmatprep.subr.mxu0 0.0
        %1412 = vmatpush1.msra.mxu0 0.0
        %1413 = vmatprep.subr.mxu0 0.0
        %1414 = vmatpush1.msra.mxu0 0.0
        %1415 = vmatprep.subr.mxu0 0.0
        %1416 = vmatpush1.msra.mxu0 0.0
        %1417 = vmatprep.subr.mxu0 0.0
        %1418 = vmatpush1.msra.mxu0 0.0
        %1419 = vmatprep.subr.mxu0 0.0
        %1420 = vmatpush1.msra.mxu0 0.0
        %1421 = vmatprep.subr.mxu0 0.0
        %1422 = vmatpush1.msra.mxu0 0.0
        %1423 = vmatprep.subr.mxu0 0.0
        %1424 = vmatpush1.msra.mxu0 0.0
        %1425 = vmatprep.subr.mxu0 0.0
        %1426 = vmatpush1.msra.mxu0 0.0
        %1427 = vmatprep.subr.mxu0 0.0
        %1428 = vmatpush1.msra.mxu0 0.0
        %1429 = vmatprep.mubr.f32.mxu0 0.0
        %1430 = vmatmul.mubr.f32.gmra.mrb[0].mxu0 %v1286
        %v1431 = vpop.f32.mrb[0].mxu0
        %v1432 = vadd.f32 0.0, %v1431
        %v1433 = vpop.f32.mrb[0].mxu0
        %1434 = vdwg.mxu0
        %v1435 = vadd.f32 %v1271, %v1361
        %v1436 = vadd.f32 %v1272, %v1363
        %v1437 = vadd.f32 %v1273, %v1432
        %s1438 = scalar_lea.vmem %s1, 56
        %v1439 = vld [vmem:[%s1438] sm:$0xff]
        %1440 = vrot.lane.b32.xlu0 %v299, 91
        %v1441 = vpop.permute.xlu0 %1440
        %1442 = vrot.lane.b32.xlu0 %v306, 91
        %v1443 = vpop.permute.xlu0 %1442
        %1444 = vrot.lane.b32.xlu0 %v300, 91
        %v1445 = vpop.permute.xlu0 %1444
        %vm1446 = vcmask 744448
        %v1447 = vsel %vm1446, %v1441, %v1443
        %v1448 = vsel %vm1446, %v1443, %v1445
        %v1450 = vsel %vm316, %v1439, 0
        %v1452 = vsel %vm320, %v1447, 0
        %v1454 = vsel %vm320, %v1448, 0
        %v1456 = vsel %vm320, %v1445, 0
        %1458 = vmatprep.subr.mxu0 %v1454
        %1459 = vmatpush1.msra.mxu0 %v1452
        %1460 = vmatprep.subr.mxu0 0.0
        %1461 = vmatpush1.msra.mxu0 0.0
        %1462 = vmatprep.subr.mxu0 0.0
        %1463 = vmatpush1.msra.mxu0 0.0
        %1464 = vmatprep.subr.mxu0 0.0
        %1465 = vmatpush1.msra.mxu0 0.0
        %1466 = vmatprep.subr.mxu0 0.0
        %1467 = vmatpush1.msra.mxu0 0.0
        %1468 = vmatprep.subr.mxu0 0.0
        %1469 = vmatpush1.msra.mxu0 0.0
        %1470 = vmatprep.subr.mxu0 0.0
        %1471 = vmatpush1.msra.mxu0 0.0
        %1472 = vmatprep.subr.mxu0 0.0
        %1473 = vmatpush1.msra.mxu0 0.0
        %1474 = vmatprep.subr.mxu0 0.0
        %1475 = vmatpush1.msra.mxu0 0.0
        %1476 = vmatprep.subr.mxu0 0.0
        %1477 = vmatpush1.msra.mxu0 0.0
        %1478 = vmatprep.subr.mxu0 0.0
        %1479 = vmatpush1.msra.mxu0 0.0
        %1480 = vmatprep.subr.mxu0 0.0
        %1481 = vmatpush1.msra.mxu0 0.0
        %1482 = vmatprep.subr.mxu0 0.0
        %1483 = vmatpush1.msra.mxu0 0.0
        %1484 = vmatprep.subr.mxu0 0.0
        %1485 = vmatpush1.msra.mxu0 0.0
        %1486 = vmatprep.subr.mxu0 0.0
        %1487 = vmatpush1.msra.mxu0 0.0
        %1488 = vmatprep.subr.mxu0 0.0
        %1489 = vmatpush1.msra.mxu0 0.0
        %1490 = vmatprep.subr.mxu0 0.0
        %1491 = vmatpush1.msra.mxu0 0.0
        %1492 = vmatprep.subr.mxu0 0.0
        %1493 = vmatpush1.msra.mxu0 0.0
        %1494 = vmatprep.subr.mxu0 0.0
        %1495 = vmatpush1.msra.mxu0 0.0
        %1496 = vmatprep.subr.mxu0 0.0
        %1497 = vmatpush1.msra.mxu0 0.0
        %1498 = vmatprep.subr.mxu0 0.0
        %1499 = vmatpush1.msra.mxu0 0.0
        %1500 = vmatprep.subr.mxu0 0.0
        %1501 = vmatpush1.msra.mxu0 0.0
        %1502 = vmatprep.subr.mxu0 0.0
        %1503 = vmatpush1.msra.mxu0 0.0
        %1504 = vmatprep.subr.mxu0 0.0
        %1505 = vmatpush1.msra.mxu0 0.0
        %1506 = vmatprep.subr.mxu0 0.0
        %1507 = vmatpush1.msra.mxu0 0.0
        %1508 = vmatprep.subr.mxu0 0.0
        %1509 = vmatpush1.msra.mxu0 0.0
        %1510 = vmatprep.subr.mxu0 0.0
        %1511 = vmatpush1.msra.mxu0 0.0
        %1512 = vmatprep.subr.mxu0 0.0
        %1513 = vmatpush1.msra.mxu0 0.0
        %1514 = vmatprep.subr.mxu0 0.0
        %1515 = vmatpush1.msra.mxu0 0.0
        %1516 = vmatprep.subr.mxu0 0.0
        %1517 = vmatpush1.msra.mxu0 0.0
        %1518 = vmatprep.subr.mxu0 0.0
        %1519 = vmatpush1.msra.mxu0 0.0
        %1520 = vmatprep.subr.mxu0 0.0
        %1521 = vmatpush1.msra.mxu0 0.0
        %1522 = vmatprep.mubr.f32.mxu0 0.0
        %1523 = vmatmul.mubr.f32.gmra.mrb[0].mxu0 %v1450
        %v1524 = vpop.f32.mrb[0].mxu0
        %v1525 = vadd.f32 0.0, %v1524
        %v1526 = vpop.f32.mrb[0].mxu0
        %v1527 = vadd.f32 0.0, %v1526
        %1528 = vdwg.mxu0
        %1529 = vmatprep.subr.mxu0 0.0
        %1530 = vmatpush1.msra.mxu0 %v1456
        %1531 = vmatprep.subr.mxu0 0.0
        %1532 = vmatpush1.msra.mxu0 0.0
        %1533 = vmatprep.subr.mxu0 0.0
        %1534 = vmatpush1.msra.mxu0 0.0
        %1535 = vmatprep.subr.mxu0 0.0
        %1536 = vmatpush1.msra.mxu0 0.0
        %1537 = vmatprep.subr.mxu0 0.0
        %1538 = vmatpush1.msra.mxu0 0.0
        %1539 = vmatprep.subr.mxu0 0.0
        %1540 = vmatpush1.msra.mxu0 0.0
        %1541 = vmatprep.subr.mxu0 0.0
        %1542 = vmatpush1.msra.mxu0 0.0
        %1543 = vmatprep.subr.mxu0 0.0
        %1544 = vmatpush1.msra.mxu0 0.0
        %1545 = vmatprep.subr.mxu0 0.0
        %1546 = vmatpush1.msra.mxu0 0.0
        %1547 = vmatprep.subr.mxu0 0.0
        %1548 = vmatpush1.msra.mxu0 0.0
        %1549 = vmatprep.subr.mxu0 0.0
        %1550 = vmatpush1.msra.mxu0 0.0
        %1551 = vmatprep.subr.mxu0 0.0
        %1552 = vmatpush1.msra.mxu0 0.0
        %1553 = vmatprep.subr.mxu0 0.0
        %1554 = vmatpush1.msra.mxu0 0.0
        %1555 = vmatprep.subr.mxu0 0.0
        %1556 = vmatpush1.msra.mxu0 0.0
        %1557 = vmatprep.subr.mxu0 0.0
        %1558 = vmatpush1.msra.mxu0 0.0
        %1559 = vmatprep.subr.mxu0 0.0
        %1560 = vmatpush1.msra.mxu0 0.0
        %1561 = vmatprep.subr.mxu0 0.0
        %1562 = vmatpush1.msra.mxu0 0.0
        %1563 = vmatprep.subr.mxu0 0.0
        %1564 = vmatpush1.msra.mxu0 0.0
        %1565 = vmatprep.subr.mxu0 0.0
        %1566 = vmatpush1.msra.mxu0 0.0
        %1567 = vmatprep.subr.mxu0 0.0
        %1568 = vmatpush1.msra.mxu0 0.0
        %1569 = vmatprep.subr.mxu0 0.0
        %1570 = vmatpush1.msra.mxu0 0.0
        %1571 = vmatprep.subr.mxu0 0.0
        %1572 = vmatpush1.msra.mxu0 0.0
        %1573 = vmatprep.subr.mxu0 0.0
        %1574 = vmatpush1.msra.mxu0 0.0
        %1575 = vmatprep.subr.mxu0 0.0
        %1576 = vmatpush1.msra.mxu0 0.0
        %1577 = vmatprep.subr.mxu0 0.0
        %1578 = vmatpush1.msra.mxu0 0.0
        %1579 = vmatprep.subr.mxu0 0.0
        %1580 = vmatpush1.msra.mxu0 0.0
        %1581 = vmatprep.subr.mxu0 0.0
        %1582 = vmatpush1.msra.mxu0 0.0
        %1583 = vmatprep.subr.mxu0 0.0
        %1584 = vmatpush1.msra.mxu0 0.0
        %1585 = vmatprep.subr.mxu0 0.0
        %1586 = vmatpush1.msra.mxu0 0.0
        %1587 = vmatprep.subr.mxu0 0.0
        %1588 = vmatpush1.msra.mxu0 0.0
        %1589 = vmatprep.subr.mxu0 0.0
        %1590 = vmatpush1.msra.mxu0 0.0
        %1591 = vmatprep.subr.mxu0 0.0
        %1592 = vmatpush1.msra.mxu0 0.0
        %1593 = vmatprep.mubr.f32.mxu0 0.0
        %1594 = vmatmul.mubr.f32.gmra.mrb[0].mxu0 %v1450
        %v1595 = vpop.f32.mrb[0].mxu0
        %v1596 = vadd.f32 0.0, %v1595
        %v1597 = vpop.f32.mrb[0].mxu0
        %1598 = vdwg.mxu0
        %v1599 = vadd.f32 %v1435, %v1525
        %v1600 = vadd.f32 %v1436, %v1527
        %v1601 = vadd.f32 %v1437, %v1596
        %s1602 = scalar_lea.vmem %s1, 64
        %v1603 = vld [vmem:[%s1602] sm:$0xff]
        %1604 = vrot.lane.b32.xlu0 %v299, 90
        %v1605 = vpop.permute.xlu0 %1604
        %1606 = vrot.lane.b32.xlu0 %v306, 90
        %v1607 = vpop.permute.xlu0 %1606
        %1608 = vrot.lane.b32.xlu0 %v300, 90
        %v1609 = vpop.permute.xlu0 %1608
        %vm1610 = vcmask 736256
        %v1611 = vsel %vm1610, %v1605, %v1607
        %v1612 = vsel %vm1610, %v1607, %v1609
        %v1614 = vsel %vm316, %v1603, 0
        %v1616 = vsel %vm320, %v1611, 0
        %v1618 = vsel %vm320, %v1612, 0
        %v1620 = vsel %vm320, %v1609, 0
        %1622 = vmatprep.subr.mxu0 %v1618
        %1623 = vmatpush1.msra.mxu0 %v1616
        %1624 = vmatprep.subr.mxu0 0.0
        %1625 = vmatpush1.msra.mxu0 0.0
        %1626 = vmatprep.subr.mxu0 0.0
        %1627 = vmatpush1.msra.mxu0 0.0
        %1628 = vmatprep.subr.mxu0 0.0
        %1629 = vmatpush1.msra.mxu0 0.0
        %1630 = vmatprep.subr.mxu0 0.0
        %1631 = vmatpush1.msra.mxu0 0.0
        %1632 = vmatprep.subr.mxu0 0.0
        %1633 = vmatpush1.msra.mxu0 0.0
        %1634 = vmatprep.subr.mxu0 0.0
        %1635 = vmatpush1.msra.mxu0 0.0
        %1636 = vmatprep.subr.mxu0 0.0
        %1637 = vmatpush1.msra.mxu0 0.0
        %1638 = vmatprep.subr.mxu0 0.0
        %1639 = vmatpush1.msra.mxu0 0.0
        %1640 = vmatprep.subr.mxu0 0.0
        %1641 = vmatpush1.msra.mxu0 0.0
        %1642 = vmatprep.subr.mxu0 0.0
        %1643 = vmatpush1.msra.mxu0 0.0
        %1644 = vmatprep.subr.mxu0 0.0
        %1645 = vmatpush1.msra.mxu0 0.0
        %1646 = vmatprep.subr.mxu0 0.0
        %1647 = vmatpush1.msra.mxu0 0.0
        %1648 = vmatprep.subr.mxu0 0.0
        %1649 = vmatpush1.msra.mxu0 0.0
        %1650 = vmatprep.subr.mxu0 0.0
        %1651 = vmatpush1.msra.mxu0 0.0
        %1652 = vmatprep.subr.mxu0 0.0
        %1653 = vmatpush1.msra.mxu0 0.0
        %1654 = vmatprep.subr.mxu0 0.0
        %1655 = vmatpush1.msra.mxu0 0.0
        %1656 = vmatprep.subr.mxu0 0.0
        %1657 = vmatpush1.msra.mxu0 0.0
        %1658 = vmatprep.subr.mxu0 0.0
        %1659 = vmatpush1.msra.mxu0 0.0
        %1660 = vmatprep.subr.mxu0 0.0
        %1661 = vmatpush1.msra.mxu0 0.0
        %1662 = vmatprep.subr.mxu0 0.0
        %1663 = vmatpush1.msra.mxu0 0.0
        %1664 = vmatprep.subr.mxu0 0.0
        %1665 = vmatpush1.msra.mxu0 0.0
        %1666 = vmatprep.subr.mxu0 0.0
        %1667 = vmatpush1.msra.mxu0 0.0
        %1668 = vmatprep.subr.mxu0 0.0
        %1669 = vmatpush1.msra.mxu0 0.0
        %1670 = vmatprep.subr.mxu0 0.0
        %1671 = vmatpush1.msra.mxu0 0.0
        %1672 = vmatprep.subr.mxu0 0.0
        %1673 = vmatpush1.msra.mxu0 0.0
        %1674 = vmatprep.subr.mxu0 0.0
        %1675 = vmatpush1.msra.mxu0 0.0
        %1676 = vmatprep.subr.mxu0 0.0
        %1677 = vmatpush1.msra.mxu0 0.0
        %1678 = vmatprep.subr.mxu0 0.0
        %1679 = vmatpush1.msra.mxu0 0.0
        %1680 = vmatprep.subr.mxu0 0.0
        %1681 = vmatpush1.msra.mxu0 0.0
        %1682 = vmatprep.subr.mxu0 0.0
        %1683 = vmatpush1.msra.mxu0 0.0
        %1684 = vmatprep.subr.mxu0 0.0
        %1685 = vmatpush1.msra.mxu0 0.0
        %1686 = vmatprep.mubr.f32.mxu0 0.0
        %1687 = vmatmul.mubr.f32.gmra.mrb[0].mxu0 %v1614
        %v1688 = vpop.f32.mrb[0].mxu0
        %v1689 = vadd.f32 0.0, %v1688
        %v1690 = vpop.f32.mrb[0].mxu0
        %v1691 = vadd.f32 0.0, %v1690
        %1692 = vdwg.mxu0
        %1693 = vmatprep.subr.mxu0 0.0
        %1694 = vmatpush1.msra.mxu0 %v1620
        %1695 = vmatprep.subr.mxu0 0.0
        %1696 = vmatpush1.msra.mxu0 0.0
        %1697 = vmatprep.subr.mxu0 0.0
        %1698 = vmatpush1.msra.mxu0 0.0
        %1699 = vmatprep.subr.mxu0 0.0
        %1700 = vmatpush1.msra.mxu0 0.0
        %1701 = vmatprep.subr.mxu0 0.0
        %1702 = vmatpush1.msra.mxu0 0.0
        %1703 = vmatprep.subr.mxu0 0.0
        %1704 = vmatpush1.msra.mxu0 0.0
        %1705 = vmatprep.subr.mxu0 0.0
        %1706 = vmatpush1.msra.mxu0 0.0
        %1707 = vmatprep.subr.mxu0 0.0
        %1708 = vmatpush1.msra.mxu0 0.0
        %1709 = vmatprep.subr.mxu0 0.0
        %1710 = vmatpush1.msra.mxu0 0.0
        %1711 = vmatprep.subr.mxu0 0.0
        %1712 = vmatpush1.msra.mxu0 0.0
        %1713 = vmatprep.subr.mxu0 0.0
        %1714 = vmatpush1.msra.mxu0 0.0
        %1715 = vmatprep.subr.mxu0 0.0
        %1716 = vmatpush1.msra.mxu0 0.0
        %1717 = vmatprep.subr.mxu0 0.0
        %1718 = vmatpush1.msra.mxu0 0.0
        %1719 = vmatprep.subr.mxu0 0.0
        %1720 = vmatpush1.msra.mxu0 0.0
        %1721 = vmatprep.subr.mxu0 0.0
        %1722 = vmatpush1.msra.mxu0 0.0
        %1723 = vmatprep.subr.mxu0 0.0
        %1724 = vmatpush1.msra.mxu0 0.0
        %1725 = vmatprep.subr.mxu0 0.0
        %1726 = vmatpush1.msra.mxu0 0.0
        %1727 = vmatprep.subr.mxu0 0.0
        %1728 = vmatpush1.msra.mxu0 0.0
        %1729 = vmatprep.subr.mxu0 0.0
        %1730 = vmatpush1.msra.mxu0 0.0
        %1731 = vmatprep.subr.mxu0 0.0
        %1732 = vmatpush1.msra.mxu0 0.0
        %1733 = vmatprep.subr.mxu0 0.0
        %1734 = vmatpush1.msra.mxu0 0.0
        %1735 = vmatprep.subr.mxu0 0.0
        %1736 = vmatpush1.msra.mxu0 0.0
        %1737 = vmatprep.subr.mxu0 0.0
        %1738 = vmatpush1.msra.mxu0 0.0
        %1739 = vmatprep.subr.mxu0 0.0
        %1740 = vmatpush1.msra.mxu0 0.0
        %1741 = vmatprep.subr.mxu0 0.0
        %1742 = vmatpush1.msra.mxu0 0.0
        %1743 = vmatprep.subr.mxu0 0.0
        %1744 = vmatpush1.msra.mxu0 0.0
        %1745 = vmatprep.subr.mxu0 0.0
        %1746 = vmatpush1.msra.mxu0 0.0
        %1747 = vmatprep.subr.mxu0 0.0
        %1748 = vmatpush1.msra.mxu0 0.0
        %1749 = vmatprep.subr.mxu0 0.0
        %1750 = vmatpush1.msra.mxu0 0.0
        %1751 = vmatprep.subr.mxu0 0.0
        %1752 = vmatpush1.msra.mxu0 0.0
        %1753 = vmatprep.subr.mxu0 0.0
        %1754 = vmatpush1.msra.mxu0 0.0
        %1755 = vmatprep.subr.mxu0 0.0
        %1756 = vmatpush1.msra.mxu0 0.0
        %1757 = vmatprep.mubr.f32.mxu0 0.0
        %1758 = vmatmul.mubr.f32.gmra.mrb[0].mxu0 %v1614
        %v1759 = vpop.f32.mrb[0].mxu0
        %v1760 = vadd.f32 0.0, %v1759
        %v1761 = vpop.f32.mrb[0].mxu0
        %1762 = vdwg.mxu0
        %v1763 = vadd.f32 %v1599, %v1689
        %v1764 = vadd.f32 %v1600, %v1691
        %v1765 = vadd.f32 %v1601, %v1760
        %v1766 = vld [vmem:[%s3] sm:$0xff]
        %1768 = vset.pattern.permute.xlu0 0
        %1769 = vperm.xlu0 %1768, %v1766
        %v1770 = vpop.permute.xlu0 %1769
        %v1772 = vmul.f32 %v1763, %v1770
        %v1773 = vmul.f32 %v1764, %v1770
        %v1774 = vmul.f32 %v1765, %v1770
        %v1775 = vld [vmem:[%s4] sm:$0xff]
        %1777 = vset.pattern.permute.xlu0 0
        %1778 = vperm.xlu0 %1777, %v1775
        %v1779 = vpop.permute.xlu0 %1778
        %v1781 = vadd.f32 %v1772, %v1779
        %v1782 = vadd.f32 %v1773, %v1779
        %v1783 = vadd.f32 %v1774, %v1779
        %v1784 = vld [vmem:[%s2] sm:$0xff]
        %vm1785 = vcmask 64512
        %v1787 = vsel %vm1785, %v1784, 0
        %1789 = vmatprep.subr.mxu0 %v1782
        %1790 = vmatpush1.msra.mxu0 %v1781
        %1791 = vmatprep.subr.mxu0 0.0
        %1792 = vmatpush1.msra.mxu0 0.0
        %1793 = vmatprep.subr.mxu0 0.0
        %1794 = vmatpush1.msra.mxu0 0.0
        %1795 = vmatprep.subr.mxu0 0.0
        %1796 = vmatpush1.msra.mxu0 0.0
        %1797 = vmatprep.subr.mxu0 0.0
        %1798 = vmatpush1.msra.mxu0 0.0
        %1799 = vmatprep.subr.mxu0 0.0
        %1800 = vmatpush1.msra.mxu0 0.0
        %1801 = vmatprep.subr.mxu0 0.0
        %1802 = vmatpush1.msra.mxu0 0.0
        %1803 = vmatprep.subr.mxu0 0.0
        %1804 = vmatpush1.msra.mxu0 0.0
        %1805 = vmatprep.subr.mxu0 0.0
        %1806 = vmatpush1.msra.mxu0 0.0
        %1807 = vmatprep.subr.mxu0 0.0
        %1808 = vmatpush1.msra.mxu0 0.0
        %1809 = vmatprep.subr.mxu0 0.0
        %1810 = vmatpush1.msra.mxu0 0.0
        %1811 = vmatprep.subr.mxu0 0.0
        %1812 = vmatpush1.msra.mxu0 0.0
        %1813 = vmatprep.subr.mxu0 0.0
        %1814 = vmatpush1.msra.mxu0 0.0
        %1815 = vmatprep.subr.mxu0 0.0
        %1816 = vmatpush1.msra.mxu0 0.0
        %1817 = vmatprep.subr.mxu0 0.0
        %1818 = vmatpush1.msra.mxu0 0.0
        %1819 = vmatprep.subr.mxu0 0.0
        %1820 = vmatpush1.msra.mxu0 0.0
        %1821 = vmatprep.subr.mxu0 0.0
        %1822 = vmatpush1.msra.mxu0 0.0
        %1823 = vmatprep.subr.mxu0 0.0
        %1824 = vmatpush1.msra.mxu0 0.0
        %1825 = vmatprep.subr.mxu0 0.0
        %1826 = vmatpush1.msra.mxu0 0.0
        %1827 = vmatprep.subr.mxu0 0.0
        %1828 = vmatpush1.msra.mxu0 0.0
        %1829 = vmatprep.subr.mxu0 0.0
        %1830 = vmatpush1.msra.mxu0 0.0
        %1831 = vmatprep.subr.mxu0 0.0
        %1832 = vmatpush1.msra.mxu0 0.0
        %1833 = vmatprep.subr.mxu0 0.0
        %1834 = vmatpush1.msra.mxu0 0.0
        %1835 = vmatprep.subr.mxu0 0.0
        %1836 = vmatpush1.msra.mxu0 0.0
        %1837 = vmatprep.subr.mxu0 0.0
        %1838 = vmatpush1.msra.mxu0 0.0
        %1839 = vmatprep.subr.mxu0 0.0
        %1840 = vmatpush1.msra.mxu0 0.0
        %1841 = vmatprep.subr.mxu0 0.0
        %1842 = vmatpush1.msra.mxu0 0.0
        %1843 = vmatprep.subr.mxu0 0.0
        %1844 = vmatpush1.msra.mxu0 0.0
        %1845 = vmatprep.subr.mxu0 0.0
        %1846 = vmatpush1.msra.mxu0 0.0
        %1847 = vmatprep.subr.mxu0 0.0
        %1848 = vmatpush1.msra.mxu0 0.0
        %1849 = vmatprep.subr.mxu0 0.0
        %1850 = vmatpush1.msra.mxu0 0.0
        %1851 = vmatprep.subr.mxu0 0.0
        %1852 = vmatpush1.msra.mxu0 0.0
        %1853 = vmatprep.mubr.f32.mxu0 0.0
        %1854 = vmatmul.mubr.f32.gmra.mrb[0].mxu0 %v1787
        %v1855 = vpop.f32.mrb[0].mxu0
        %v1856 = vadd.f32 0.0, %v1855
        %v1857 = vpop.f32.mrb[0].mxu0
        %v1858 = vadd.f32 0.0, %v1857
        %1859 = vdwg.mxu0
        %1860 = vmatprep.subr.mxu0 0.0
        %1861 = vmatpush1.msra.mxu0 %v1783
        %1862 = vmatprep.subr.mxu0 0.0
        %1863 = vmatpush1.msra.mxu0 0.0
        %1864 = vmatprep.subr.mxu0 0.0
        %1865 = vmatpush1.msra.mxu0 0.0
        %1866 = vmatprep.subr.mxu0 0.0
        %1867 = vmatpush1.msra.mxu0 0.0
        %1868 = vmatprep.subr.mxu0 0.0
        %1869 = vmatpush1.msra.mxu0 0.0
        %1870 = vmatprep.subr.mxu0 0.0
        %1871 = vmatpush1.msra.mxu0 0.0
        %1872 = vmatprep.subr.mxu0 0.0
        %1873 = vmatpush1.msra.mxu0 0.0
        %1874 = vmatprep.subr.mxu0 0.0
        %1875 = vmatpush1.msra.mxu0 0.0
        %1876 = vmatprep.subr.mxu0 0.0
        %1877 = vmatpush1.msra.mxu0 0.0
        %1878 = vmatprep.subr.mxu0 0.0
        %1879 = vmatpush1.msra.mxu0 0.0
        %1880 = vmatprep.subr.mxu0 0.0
        %1881 = vmatpush1.msra.mxu0 0.0
        %1882 = vmatprep.subr.mxu0 0.0
        %1883 = vmatpush1.msra.mxu0 0.0
        %1884 = vmatprep.subr.mxu0 0.0
        %1885 = vmatpush1.msra.mxu0 0.0
        %1886 = vmatprep.subr.mxu0 0.0
        %1887 = vmatpush1.msra.mxu0 0.0
        %1888 = vmatprep.subr.mxu0 0.0
        %1889 = vmatpush1.msra.mxu0 0.0
        %1890 = vmatprep.subr.mxu0 0.0
        %1891 = vmatpush1.msra.mxu0 0.0
        %1892 = vmatprep.subr.mxu0 0.0
        %1893 = vmatpush1.msra.mxu0 0.0
        %1894 = vmatprep.subr.mxu0 0.0
        %1895 = vmatpush1.msra.mxu0 0.0
        %1896 = vmatprep.subr.mxu0 0.0
        %1897 = vmatpush1.msra.mxu0 0.0
        %1898 = vmatprep.subr.mxu0 0.0
        %1899 = vmatpush1.msra.mxu0 0.0
        %1900 = vmatprep.subr.mxu0 0.0
        %1901 = vmatpush1.msra.mxu0 0.0
        %1902 = vmatprep.subr.mxu0 0.0
        %1903 = vmatpush1.msra.mxu0 0.0
        %1904 = vmatprep.subr.mxu0 0.0
        %1905 = vmatpush1.msra.mxu0 0.0
        %1906 = vmatprep.subr.mxu0 0.0
        %1907 = vmatpush1.msra.mxu0 0.0
        %1908 = vmatprep.subr.mxu0 0.0
        %1909 = vmatpush1.msra.mxu0 0.0
        %1910 = vmatprep.subr.mxu0 0.0
        %1911 = vmatpush1.msra.mxu0 0.0
        %1912 = vmatprep.subr.mxu0 0.0
        %1913 = vmatpush1.msra.mxu0 0.0
        %1914 = vmatprep.subr.mxu0 0.0
        %1915 = vmatpush1.msra.mxu0 0.0
        %1916 = vmatprep.subr.mxu0 0.0
        %1917 = vmatpush1.msra.mxu0 0.0
        %1918 = vmatprep.subr.mxu0 0.0
        %1919 = vmatpush1.msra.mxu0 0.0
        %1920 = vmatprep.subr.mxu0 0.0
        %1921 = vmatpush1.msra.mxu0 0.0
        %1922 = vmatprep.subr.mxu0 0.0
        %1923 = vmatpush1.msra.mxu0 0.0
        %1924 = vmatprep.mubr.f32.mxu0 0.0
        %1925 = vmatmul.mubr.f32.gmra.mrb[0].mxu0 %v1787
        %v1926 = vpop.f32.mrb[0].mxu0
        %v1927 = vadd.f32 0.0, %v1926
        %v1928 = vpop.f32.mrb[0].mxu0
        %1929 = vdwg.mxu0
        %v1930 = vld [vmem:[%s5] sm:$0xff]
        %1932 = vset.pattern.permute.xlu0 0
        %1933 = vperm.xlu0 %1932, %v1930
        %v1934 = vpop.permute.xlu0 %1933
        %v1936 = vmul.f32 %v1856, %v1934
        %v1937 = vmul.f32 %v1858, %v1934
        %v1938 = vmul.f32 %v1927, %v1934
        %v1939 = vld [vmem:[%s6] sm:$0xff]
        %1941 = vset.pattern.permute.xlu0 0
        %1942 = vperm.xlu0 %1941, %v1939
        %v1943 = vpop.permute.xlu0 %1942
        %v1945 = vadd.f32 %v1936, %v1943
        %v1946 = vadd.f32 %v1937, %v1943
        %v1947 = vadd.f32 %v1938, %v1943
        %1948 = vst [vmem:[%s271] sm:$0xff] %v1945
        %1949 = vst [vmem:[%s271 + $0x8] sm:$0xff] %v1946
        %vm1950 = vcmask 261120
        %1951 = vst.msk [vmem:[%s271 + $0x10] sm:$0xff] %vm1950, %v1947
        %s1952 = sand.u32 %s181, 1
        %s1953 = scalar_lea.sflag [#allocation3], %s1952
        %s1954 = sand.u32 %s181, 1
        %s1955 = smul.addr %s1954, 24
        %s1956 = scalar_lea.vmem [#allocation2], %s1955
        // Predicated region
        $region49: #{tpu_custom_call.1} parent=47 // pred_check
          %p1957 = pneg %p191
        $region50: #{tpu_custom_call.1} parent=47 // pred_check_branch
          %1959 = sbr.rel (%p1957) target = $region52
        $region51: #{tpu_custom_call.1} parent=47 // pred_region
          %s1961 = ssub.s32 384, 384
          %1962 = vsyncadd %s1953, %s1961
          %s1963 = smul.addr %s21, 3
          %s1964 = smul.addr %s1963, 128
          %s1965 = scalar_lea.hbm %s7, %s1964
          %s1967 = sshll.u32 %s1956, 4
          %s1968 = int_to_ptr.vmem [resolvable:$true] %s1967
          %1970 = dma.vmem_to_hbm [thread:$0]  %s1968, 384, %s1965, %s1953
        $region52: #{tpu_custom_call.1} parent=47 // pred_fallthru
          _
      $region48: #{tpu_custom_call.1} parent=5 // pred_fallthru
        _
      %p1971 = scmp.le.s32.totalorder 2, %s16
      // Predicated region
      $region53: #{tpu_custom_call.1} parent=5 // pred_check
        %p1972 = pneg %p1971
      $region54: #{tpu_custom_call.1} parent=5 // pred_check_branch
        %1974 = sbr.rel (%p1972) target = $region56
      $region55: #{tpu_custom_call.1} parent=5 // pred_region
        %s1975 = ssub.s32 %s16, 2
        // Predicated region
        $region57: #{tpu_custom_call.1} parent=55 // pred_check
          %p1976 = pneg %p197
        $region58: #{tpu_custom_call.1} parent=55 // pred_check_branch
          %1978 = sbr.rel (%p1976) target = $region60
        $region59: #{tpu_custom_call.1} parent=55 // pred_region
          %s1979 = sand.u32 %s182, 1
          %s1980 = scalar_lea.sflag [#allocation3], %s1979
          %s1981 = sand.u32 %s182, 1
          %s1982 = smul.addr %s1981, 24
          %s1983 = scalar_lea.vmem [#allocation2], %s1982
          %1984 = dma.done %s1980, 384
        $region60: #{tpu_custom_call.1} parent=55 // pred_fallthru
          _
      $region56: #{tpu_custom_call.1} parent=5 // pred_fallthru
        _
    $region6: #{tpu_custom_call.1} parent=1 // loop_footer
      %s20 = sadd.s32 1, %s16
    $region7: #{tpu_custom_call.1} parent=1 // loop_footer_branch
      %15 = sbr.rel target = $region3
    $region8: #{tpu_custom_call.1} parent=1 // loop_exit
      _
    %1985 = vsyncpa [#allocation3], 1
    %s1986 = scalar_lea.sflag [#allocation3], 1
    %1987 = vsyncpa %s1986, 1

</llo_original>
